<compile_context>
chip_gen: v6e
topology: v6e:2x2x1
jax: 0.10.0
libtpu: 0.0.40
codegen_flags: <defaults>
</compile_context>

<pallas_src>
import functools
import math

import numpy as np
import jax
import jax.numpy as jnp
from jax.experimental import pallas as pl
from jax.experimental.pallas import tpu as pltpu


def _round_up(a, b):
    return -(-a // b) * b


def _dwt_haar_kernel(x_ref, b_ref, o_ref, *, lane_dense, n_split):
    """One (batch, C*D-tile, Hh-tile) block of the 2-D Haar DWT.

    x_ref: (1, tcd, thh, 2*W)   last axis = [even-H row | odd-H row]
    b_ref: (2, W, Wh)           bf16 column pair-sum / pair-diff (0 / +-0.5)
    o_ref: (4, tcd, thh*Wh)     lane-dense sub-bands   (lane_dense=True)
           (4, tcd, thh, Wh)    plain layout           (lane_dense=False)
    """
    _, tcd, thh, w2 = x_ref.shape
    w = w2 // 2
    wh = b_ref.shape[-1]
    r = tcd * thh

    # Even / odd image rows (H-parity split is pre-packed on the lane axis).
    xe = x_ref[0, :, :, 0:w].reshape(r, w).astype(jnp.float32)
    xo = x_ref[0, :, :, w:w2].reshape(r, w).astype(jnp.float32)

    # H-direction Haar pair: exact f32 on the VPU.
    u = xe + xo
    v = xo - xe

    bp = b_ref[0]   # (W, Wh): +0.5 on rows (2j, 2j+1)  -> W pair-sum
    bm = b_ref[1]   # (W, Wh): -0.5 / +0.5               -> W pair-diff

    def split_bf16(a):
        # Exact multi-term bf16 decomposition: sum(parts) == a (to ~2^-24 rel).
        parts = []
        for _ in range(n_split - 1):
            p = a.astype(jnp.bfloat16)
            parts.append(p)
            a = a - p.astype(jnp.float32)
        parts.append(a.astype(jnp.bfloat16))
        return parts

    def mxu(parts, b):
        # B entries (0, +-0.5) are exact in bf16, so each pass is exact.
        acc = jnp.dot(parts[0], b, preferred_element_type=jnp.float32)
        for p in parts[1:]:
            acc = acc + jnp.dot(p, b, preferred_element_type=jnp.float32)
        return acc

    us = split_bf16(u)
    vs = split_bf16(v)

    ll = mxu(us, bp)
    hl = mxu(us, bm)
    lh = mxu(vs, bp)
    hh = mxu(vs, bm)

    shp = (tcd, thh * wh) if lane_dense else (tcd, thh, wh)
    o_ref[0] = ll.reshape(shp).astype(o_ref.dtype)
    o_ref[1] = hl.reshape(shp).astype(o_ref.dtype)
    o_ref[2] = lh.reshape(shp).astype(o_ref.dtype)
    o_ref[3] = hh.reshape(shp).astype(o_ref.dtype)


def _vmem_budget():
    """(vmem_limit_bytes, per-block padded footprint budget) per TPU generation."""
    kind = ""
    try:
        kind = jax.devices()[0].device_kind.lower()
    except Exception:
        pass
    if "v5" in kind or "v6" in kind:
        # 128 MiB physical VMEM: big blocks -> fewer grid steps, long DMA bursts.
        return 96 * 1024 * 1024, 28 * 1024 * 1024
    # v7x (64 MiB VMEM per TensorCore) or unknown: stay conservative.
    return 48 * 1024 * 1024, 12 * 1024 * 1024


def _select_tiles(N, CD, Hh, Wh, W, itemsize, lane_dense, budget):
    """Pick (tcd, thh) from the *padded* VMEM footprint: lane/sublane padding,
    double-buffered input + output blocks and live f32 intermediates."""
    sub = 16 if itemsize == 2 else 8

    def footprint(tcd, thh):
        in_blk = tcd * _round_up(thh, sub) * _round_up(2 * W, 128) * itemsize
        if lane_dense:
            out_blk = 4 * _round_up(tcd, sub) * _round_up(thh * Wh, 128) * itemsize
        else:
            out_blk = 4 * tcd * _round_up(thh, sub) * _round_up(Wh, 128) * itemsize
        r = _round_up(tcd * thh, 8)
        interm = (4 * r * _round_up(W, 128) * 4        # xe, xo, u, v (f32)
                  + 3 * r * _round_up(W, 128) * 2      # live bf16 split terms
                  + 4 * r * _round_up(Wh, 128) * 4)    # ll, hl, lh, hh (f32)
        b_mat = 2 * _round_up(W, 16) * _round_up(Wh, 128) * 2
        return 2 * in_blk + 2 * out_blk + interm + b_mat

    if lane_dense:
        # out block (4, tcd, thh*Wh): need tcd % 8 == 0 (or tcd == CD) and
        # thh*Wh % 128 == 0 (or thh == Hh).
        h_step = _round_up(128 // math.gcd(Wh, 128), 8)
        cd_step = 8
        base_tcd = CD if CD < 8 else 8
    else:
        h_step = 8
        cd_step = 1
        base_tcd = 1

    # H tile: keep the whole Hh slab unless the minimum viable block blows the budget.
    thh = Hh
    while thh > h_step and footprint(base_tcd, thh) > budget:
        thh = max(h_step, (thh // 2) // h_step * h_step)

    # C*D tile: largest valid tile under the budget (ragged last block is fine).
    tcd = base_tcd
    c = cd_step
    while c <= CD:
        if footprint(c, thh) > budget:
            break
        if (not lane_dense) or c % 8 == 0 or c == CD:
            tcd = max(tcd, c)
        c += cd_step
    if footprint(CD, thh) <= budget:
        tcd = CD

    # Megacore friendliness (v7x has 2 TensorCores): keep >= ~4 parallel steps.
    hh_tiles = -(-Hh // thh)
    want_cd_tiles = -(-4 // max(1, N * hh_tiles))
    if -(-CD // tcd) < want_cd_tiles and tcd > base_tcd:
        new_tcd = max(base_tcd, _round_up(-(-CD // want_cd_tiles), cd_step))
        if new_tcd < tcd:
            tcd = new_tcd
    return tcd, thh


def dwt3d_forward(x, *, allow_lane_dense=True):
    """Pallas DWT3d forward.  x: (N, C, D, H, W) -> (N, 4*C, D, H//2, W//2)."""
    N, C, D, H, W = x.shape
    if H % 2 or W % 2:
        raise ValueError("dwt_init3d requires even H and W")
    Hh, Wh = H // 2, W // 2
    CD = C * D
    itemsize = x.dtype.itemsize

    # Lane-dense sub-band writeback (unmasked vst + contiguous DMA) when Wh < 128.
    lane_dense = allow_lane_dense and Wh < 128

    # Constant Haar column filters with the /2 folded in (0 / +-0.5: exact bf16).
    j = np.arange(Wh)
    bp = np.zeros((W, Wh), np.float32)
    bm = np.zeros((W, Wh), np.float32)
    bp[2 * j, j] = 0.5
    bp[2 * j + 1, j] = 0.5
    bm[2 * j, j] = -0.5
    bm[2 * j + 1, j] = 0.5
    b = jnp.asarray(np.stack([bp, bm]), dtype=jnp.bfloat16)

    vmem_limit, budget = _vmem_budget()
    tcd, thh = _select_tiles(N, CD, Hh, Wh, W, itemsize, lane_dense, budget)
    cd_tiles = -(-CD // tcd)
    hh_tiles = -(-Hh // thh)
    grid = (N, cd_tiles, hh_tiles)

    # Fold the H-parity bit into the lane axis (metadata-only reshape).
    xr = x.reshape(N, CD, Hh, 2 * W)

    n_split = 3 if x.dtype == jnp.float32 else 2
    kernel = functools.partial(_dwt_haar_kernel, lane_dense=lane_dense,
                               n_split=n_split)

    if lane_dense:
        out_shape = jax.ShapeDtypeStruct((N * 4, CD, Hh * Wh), x.dtype)
        out_spec = pl.BlockSpec((4, tcd, thh * Wh), lambda n, i, h: (n, i, h))
    else:
        out_shape = jax.ShapeDtypeStruct((N * 4, CD, Hh, Wh), x.dtype)
        out_spec = pl.BlockSpec((4, tcd, thh, Wh), lambda n, i, h: (n, i, h, 0))

    in_specs = [
        pl.BlockSpec((1, tcd, thh, 2 * W), lambda n, i, h: (n, i, h, 0)),
        pl.BlockSpec((2, W, Wh), lambda n, i, h: (0, 0, 0)),
    ]

    passes = 4 * n_split   # bf16 MXU matmuls per split term per sub-band pair
    cost = pl.CostEstimate(
        flops=2 * passes * (N * CD * Hh) * W * Wh,
        transcendentals=0,
        bytes_accessed=2 * x.size * itemsize + int(b.size) * 2,
    )

    out = pl.pallas_call(
        kernel,
        out_shape=out_shape,
        grid=grid,
        in_specs=in_specs,
        out_specs=out_spec,
        compiler_params=pltpu.CompilerParams(
            dimension_semantics=("parallel", "parallel", "parallel"),
            vmem_limit_bytes=vmem_limit,
        ),
        cost_estimate=cost,
    )(xr, b)

    # Metadata-only reshape to the torch.cat((LL, HL, LH, HH), dim=1) layout.
    return out.reshape(N, 4 * C, D, Hh, Wh)


def dwt3d_reference(x):
    """Direct jnp port of dwt_init3d for the correctness check."""
    x01 = x[:, :, :, 0::2, :] / 2
    x02 = x[:, :, :, 1::2, :] / 2
    x1 = x01[:, :, :, :, 0::2]
    x2 = x02[:, :, :, :, 0::2]
    x3 = x01[:, :, :, :, 1::2]
    x4 = x02[:, :, :, :, 1::2]
    x_ll = x1 + x2 + x3 + x4
    x_hl = -x1 - x2 + x3 + x4
    x_lh = -x1 + x2 - x3 + x4
    x_hh = x1 - x2 - x3 + x4
    return jnp.concatenate((x_ll, x_hl, x_lh, x_hh), axis=1)


if __name__ == "__main__":
    key = jax.random.PRNGKey(0)
    N, C, D, H, W = 2, 4, 8, 16, 16
    x = jax.random.normal(key, (N, C, D, H, W), jnp.float32)

    fwd_fast = jax.jit(functools.partial(dwt3d_forward, allow_lane_dense=True))
    try:
        out = jax.block_until_ready(fwd_fast(x))
    except Exception:
        # Lane-dense writeback needs a sublane->lane relayout reshape in-kernel;
        # if this Mosaic version rejects it, fall back to the plain layout.
        fwd_safe = jax.jit(functools.partial(dwt3d_forward, allow_lane_dense=False))
        out = jax.block_until_ready(fwd_safe(x))

    ref = jax.block_until_ready(dwt3d_reference(x))
    assert out.shape == (N, 4 * C, D, H // 2, W // 2), out.shape
    max_err = float(jnp.max(jnp.abs(out - ref)))
    assert max_err < 1e-4, f"max abs err {max_err}"

    print("KERNEL_OK")
</pallas_src>

<mosaic_0001>
module attributes {stable_mosaic.version = 11 : i64} {
  func.func @_dwt_haar_kernel(%arg0: i32, %arg1: i32, %arg2: i32, %arg3: memref<1x16x8x32xf32, #tpu.memory_space<vmem>>, %arg4: memref<2x16x8xbf16, #tpu.memory_space<vmem>>, %arg5: memref<4x16x64xf32, #tpu.memory_space<vmem>>) attributes {dimension_semantics = [#tpu.dimension_semantics<parallel>, #tpu.dimension_semantics<parallel>, #tpu.dimension_semantics<parallel>], iteration_bounds = array<i64: 2, 2, 1>, scalar_prefetch = 0 : i64, scratch_operands = 0 : i64, tpu.core_type = #tpu.core_type<tc>, window_params = [{transform_indices = @transform_0, window_bounds = array<i64: 1, 16, 8, 32>}, {pipeline_mode = #tpu.pipeline_mode<synchronous>, transform_indices = @transform_1, window_bounds = array<i64: 2, 16, 8>}, {transform_indices = @transform_2, window_bounds = array<i64: 4, 16, 64>}]} {
    %c0 = arith.constant 0 : index
    %c0_0 = arith.constant 0 : index
    %c0_1 = arith.constant 0 : index
    %c0_2 = arith.constant 0 : index
    %0 = vector.load %arg3[%c0, %c0_0, %c0_1, %c0_2] : memref<1x16x8x32xf32, #tpu.memory_space<vmem>>, vector<1x16x8x16xf32>
    %1 = vector.shape_cast %0 : vector<1x16x8x16xf32> to vector<16x8x16xf32>
    %2 = vector.shape_cast %1 : vector<16x8x16xf32> to vector<128x16xf32>
    %c0_3 = arith.constant 0 : index
    %c0_4 = arith.constant 0 : index
    %c0_5 = arith.constant 0 : index
    %c16 = arith.constant 16 : index
    %3 = vector.load %arg3[%c0_3, %c0_4, %c0_5, %c16] : memref<1x16x8x32xf32, #tpu.memory_space<vmem>>, vector<1x16x8x16xf32>
    %4 = vector.shape_cast %3 : vector<1x16x8x16xf32> to vector<16x8x16xf32>
    %5 = vector.shape_cast %4 : vector<16x8x16xf32> to vector<128x16xf32>
    %6 = arith.addf %2, %5 : vector<128x16xf32>
    %7 = arith.subf %5, %2 : vector<128x16xf32>
    %c0_6 = arith.constant 0 : index
    %c0_7 = arith.constant 0 : index
    %c0_8 = arith.constant 0 : index
    %8 = vector.load %arg4[%c0_6, %c0_7, %c0_8] : memref<2x16x8xbf16, #tpu.memory_space<vmem>>, vector<1x16x8xbf16>
    %9 = vector.shape_cast %8 : vector<1x16x8xbf16> to vector<16x8xbf16>
    %c1 = arith.constant 1 : index
    %c0_9 = arith.constant 0 : index
    %c0_10 = arith.constant 0 : index
    %10 = vector.load %arg4[%c1, %c0_9, %c0_10] : memref<2x16x8xbf16, #tpu.memory_space<vmem>>, vector<1x16x8xbf16>
    %11 = vector.shape_cast %10 : vector<1x16x8xbf16> to vector<16x8xbf16>
    %12 = arith.truncf %6 : vector<128x16xf32> to vector<128x16xbf16>
    %13 = arith.extf %12 : vector<128x16xbf16> to vector<128x16xf32>
    %14 = arith.subf %6, %13 : vector<128x16xf32>
    %15 = arith.truncf %14 : vector<128x16xf32> to vector<128x16xbf16>
    %16 = arith.extf %15 : vector<128x16xbf16> to vector<128x16xf32>
    %17 = arith.subf %14, %16 : vector<128x16xf32>
    %18 = arith.truncf %17 : vector<128x16xf32> to vector<128x16xbf16>
    %19 = arith.truncf %7 : vector<128x16xf32> to vector<128x16xbf16>
    %20 = arith.extf %19 : vector<128x16xbf16> to vector<128x16xf32>
    %21 = arith.subf %7, %20 : vector<128x16xf32>
    %22 = arith.truncf %21 : vector<128x16xf32> to vector<128x16xbf16>
    %23 = arith.extf %22 : vector<128x16xbf16> to vector<128x16xf32>
    %24 = arith.subf %21, %23 : vector<128x16xf32>
    %25 = arith.truncf %24 : vector<128x16xf32> to vector<128x16xbf16>
    %cst = arith.constant dense<0.000000e+00> : vector<128x8xf32>
    %26 = tpu.matmul %12, %9, %cst {dimension_numbers = #tpu.dot_dimension_numbers<[1], [0], [0], [1], [0, 0, 1, 1], [], []>} : vector<128x16xbf16>, vector<16x8xbf16>, vector<128x8xf32> -> vector<128x8xf32>
    %cst_11 = arith.constant dense<0.000000e+00> : vector<128x8xf32>
    %27 = tpu.matmul %15, %9, %cst_11 {dimension_numbers = #tpu.dot_dimension_numbers<[1], [0], [0], [1], [0, 0, 1, 1], [], []>} : vector<128x16xbf16>, vector<16x8xbf16>, vector<128x8xf32> -> vector<128x8xf32>
    %28 = arith.addf %26, %27 : vector<128x8xf32>
    %cst_12 = arith.constant dense<0.000000e+00> : vector<128x8xf32>
    %29 = tpu.matmul %18, %9, %cst_12 {dimension_numbers = #tpu.dot_dimension_numbers<[1], [0], [0], [1], [0, 0, 1, 1], [], []>} : vector<128x16xbf16>, vector<16x8xbf16>, vector<128x8xf32> -> vector<128x8xf32>
    %30 = arith.addf %28, %29 : vector<128x8xf32>
    %cst_13 = arith.constant dense<0.000000e+00> : vector<128x8xf32>
    %31 = tpu.matmul %12, %11, %cst_13 {dimension_numbers = #tpu.dot_dimension_numbers<[1], [0], [0], [1], [0, 0, 1, 1], [], []>} : vector<128x16xbf16>, vector<16x8xbf16>, vector<128x8xf32> -> vector<128x8xf32>
    %cst_14 = arith.constant dense<0.000000e+00> : vector<128x8xf32>
    %32 = tpu.matmul %15, %11, %cst_14 {dimension_numbers = #tpu.dot_dimension_numbers<[1], [0], [0], [1], [0, 0, 1, 1], [], []>} : vector<128x16xbf16>, vector<16x8xbf16>, vector<128x8xf32> -> vector<128x8xf32>
    %33 = arith.addf %31, %32 : vector<128x8xf32>
    %cst_15 = arith.constant dense<0.000000e+00> : vector<128x8xf32>
    %34 = tpu.matmul %18, %11, %cst_15 {dimension_numbers = #tpu.dot_dimension_numbers<[1], [0], [0], [1], [0, 0, 1, 1], [], []>} : vector<128x16xbf16>, vector<16x8xbf16>, vector<128x8xf32> -> vector<128x8xf32>
    %35 = arith.addf %33, %34 : vector<128x8xf32>
    %cst_16 = arith.constant dense<0.000000e+00> : vector<128x8xf32>
    %36 = tpu.matmul %19, %9, %cst_16 {dimension_numbers = #tpu.dot_dimension_numbers<[1], [0], [0], [1], [0, 0, 1, 1], [], []>} : vector<128x16xbf16>, vector<16x8xbf16>, vector<128x8xf32> -> vector<128x8xf32>
    %cst_17 = arith.constant dense<0.000000e+00> : vector<128x8xf32>
    %37 = tpu.matmul %22, %9, %cst_17 {dimension_numbers = #tpu.dot_dimension_numbers<[1], [0], [0], [1], [0, 0, 1, 1], [], []>} : vector<128x16xbf16>, vector<16x8xbf16>, vector<128x8xf32> -> vector<128x8xf32>
    %38 = arith.addf %36, %37 : vector<128x8xf32>
    %cst_18 = arith.constant dense<0.000000e+00> : vector<128x8xf32>
    %39 = tpu.matmul %25, %9, %cst_18 {dimension_numbers = #tpu.dot_dimension_numbers<[1], [0], [0], [1], [0, 0, 1, 1], [], []>} : vector<128x16xbf16>, vector<16x8xbf16>, vector<128x8xf32> -> vector<128x8xf32>
    %40 = arith.addf %38, %39 : vector<128x8xf32>
    %cst_19 = arith.constant dense<0.000000e+00> : vector<128x8xf32>
    %41 = tpu.matmul %19, %11, %cst_19 {dimension_numbers = #tpu.dot_dimension_numbers<[1], [0], [0], [1], [0, 0, 1, 1], [], []>} : vector<128x16xbf16>, vector<16x8xbf16>, vector<128x8xf32> -> vector<128x8xf32>
    %cst_20 = arith.constant dense<0.000000e+00> : vector<128x8xf32>
    %42 = tpu.matmul %22, %11, %cst_20 {dimension_numbers = #tpu.dot_dimension_numbers<[1], [0], [0], [1], [0, 0, 1, 1], [], []>} : vector<128x16xbf16>, vector<16x8xbf16>, vector<128x8xf32> -> vector<128x8xf32>
    %43 = arith.addf %41, %42 : vector<128x8xf32>
    %cst_21 = arith.constant dense<0.000000e+00> : vector<128x8xf32>
    %44 = tpu.matmul %25, %11, %cst_21 {dimension_numbers = #tpu.dot_dimension_numbers<[1], [0], [0], [1], [0, 0, 1, 1], [], []>} : vector<128x16xbf16>, vector<16x8xbf16>, vector<128x8xf32> -> vector<128x8xf32>
    %45 = arith.addf %43, %44 : vector<128x8xf32>
    %46 = vector.shape_cast %30 : vector<128x8xf32> to vector<16x64xf32>
    %c0_22 = arith.constant 0 : index
    %c0_23 = arith.constant 0 : index
    %c0_24 = arith.constant 0 : index
    %47 = vector.load %arg5[%c0_22, %c0_23, %c0_24] : memref<4x16x64xf32, #tpu.memory_space<vmem>>, vector<1x16x64xf32>
    %48 = vector.shape_cast %47 : vector<1x16x64xf32> to vector<16x64xf32>
    %49 = vector.shape_cast %46 : vector<16x64xf32> to vector<1x16x64xf32>
    tpu.vector_store %arg5[%c0_22, %c0_23, %c0_24], %49 {strides = array<i32>} : memref<4x16x64xf32, #tpu.memory_space<vmem>>, vector<1x16x64xf32>,
    %50 = vector.shape_cast %35 : vector<128x8xf32> to vector<16x64xf32>
    %c1_25 = arith.constant 1 : index
    %c0_26 = arith.constant 0 : index
    %c0_27 = arith.constant 0 : index
    %51 = vector.load %arg5[%c1_25, %c0_26, %c0_27] : memref<4x16x64xf32, #tpu.memory_space<vmem>>, vector<1x16x64xf32>
    %52 = vector.shape_cast %51 : vector<1x16x64xf32> to vector<16x64xf32>
    %53 = vector.shape_cast %50 : vector<16x64xf32> to vector<1x16x64xf32>
    tpu.vector_store %arg5[%c1_25, %c0_26, %c0_27], %53 {strides = array<i32>} : memref<4x16x64xf32, #tpu.memory_space<vmem>>, vector<1x16x64xf32>,
    %54 = vector.shape_cast %40 : vector<128x8xf32> to vector<16x64xf32>
    %c2 = arith.constant 2 : index
    %c0_28 = arith.constant 0 : index
    %c0_29 = arith.constant 0 : index
    %55 = vector.load %arg5[%c2, %c0_28, %c0_29] : memref<4x16x64xf32, #tpu.memory_space<vmem>>, vector<1x16x64xf32>
    %56 = vector.shape_cast %55 : vector<1x16x64xf32> to vector<16x64xf32>
    %57 = vector.shape_cast %54 : vector<16x64xf32> to vector<1x16x64xf32>
    tpu.vector_store %arg5[%c2, %c0_28, %c0_29], %57 {strides = array<i32>} : memref<4x16x64xf32, #tpu.memory_space<vmem>>, vector<1x16x64xf32>,
    %58 = vector.shape_cast %45 : vector<128x8xf32> to vector<16x64xf32>
    %c3 = arith.constant 3 : index
    %c0_30 = arith.constant 0 : index
    %c0_31 = arith.constant 0 : index
    %59 = vector.load %arg5[%c3, %c0_30, %c0_31] : memref<4x16x64xf32, #tpu.memory_space<vmem>>, vector<1x16x64xf32>
    %60 = vector.shape_cast %59 : vector<1x16x64xf32> to vector<16x64xf32>
    %61 = vector.shape_cast %58 : vector<16x64xf32> to vector<1x16x64xf32>
    tpu.vector_store %arg5[%c3, %c0_30, %c0_31], %61 {strides = array<i32>} : memref<4x16x64xf32, #tpu.memory_space<vmem>>, vector<1x16x64xf32>,
    return
  }
  func.func @transform_0(%arg0: i32, %arg1: i32, %arg2: i32) -> (i32, i32, i32, i32) {
    %c0_i32 = arith.constant 0 : i32
    %c0_i32_0 = arith.constant 0 : i32
    return %arg0, %arg1, %arg2, %c0_i32 : i32, i32, i32, i32
  }
  func.func @transform_1(%arg0: i32, %arg1: i32, %arg2: i32) -> (i32, i32, i32) {
    %c0_i32 = arith.constant 0 : i32
    %c0_i32_0 = arith.constant 0 : i32
    %c0_i32_1 = arith.constant 0 : i32
    %c0_i32_2 = arith.constant 0 : i32
    return %c0_i32, %c0_i32_0, %c0_i32_1 : i32, i32, i32
  }
  func.func @transform_2(%arg0: i32, %arg1: i32, %arg2: i32) -> (i32, i32, i32) {
    %c0_i32 = arith.constant 0 : i32
    return %arg0, %arg1, %arg2 : i32, i32, i32
  }
}

module attributes {stable_mosaic.version = 11 : i64} {
  func.func @_dwt_haar_kernel(%arg0: i32, %arg1: i32, %arg2: i32, %arg3: memref<1x16x8x32xf32, #tpu.memory_space<vmem>>, %arg4: memref<2x16x8xbf16, #tpu.memory_space<vmem>>, %arg5: memref<4x16x8x8xf32, #tpu.memory_space<vmem>>) attributes {dimension_semantics = [#tpu.dimension_semantics<parallel>, #tpu.dimension_semantics<parallel>, #tpu.dimension_semantics<parallel>], iteration_bounds = array<i64: 2, 2, 1>, scalar_prefetch = 0 : i64, scratch_operands = 0 : i64, tpu.core_type = #tpu.core_type<tc>, window_params = [{transform_indices = @transform_0, window_bounds = array<i64: 1, 16, 8, 32>}, {pipeline_mode = #tpu.pipeline_mode<synchronous>, transform_indices = @transform_1, window_bounds = array<i64: 2, 16, 8>}, {transform_indices = @transform_2, window_bounds = array<i64: 4, 16, 8, 8>}]} {
    %c0 = arith.constant 0 : index
    %c0_0 = arith.constant 0 : index
    %c0_1 = arith.constant 0 : index
    %c0_2 = arith.constant 0 : index
    %0 = vector.load %arg3[%c0, %c0_0, %c0_1, %c0_2] : memref<1x16x8x32xf32, #tpu.memory_space<vmem>>, vector<1x16x8x16xf32>
    %1 = vector.shape_cast %0 : vector<1x16x8x16xf32> to vector<16x8x16xf32>
    %2 = vector.shape_cast %1 : vector<16x8x16xf32> to vector<128x16xf32>
    %c0_3 = arith.constant 0 : index
    %c0_4 = arith.constant 0 : index
    %c0_5 = arith.constant 0 : index
    %c16 = arith.constant 16 : index
    %3 = vector.load %arg3[%c0_3, %c0_4, %c0_5, %c16] : memref<1x16x8x32xf32, #tpu.memory_space<vmem>>, vector<1x16x8x16xf32>
    %4 = vector.shape_cast %3 : vector<1x16x8x16xf32> to vector<16x8x16xf32>
    %5 = vector.shape_cast %4 : vector<16x8x16xf32> to vector<128x16xf32>
    %6 = arith.addf %2, %5 : vector<128x16xf32>
    %7 = arith.subf %5, %2 : vector<128x16xf32>
    %c0_6 = arith.constant 0 : index
    %c0_7 = arith.constant 0 : index
    %c0_8 = arith.constant 0 : index
    %8 = vector.load %arg4[%c0_6, %c0_7, %c0_8] : memref<2x16x8xbf16, #tpu.memory_space<vmem>>, vector<1x16x8xbf16>
    %9 = vector.shape_cast %8 : vector<1x16x8xbf16> to vector<16x8xbf16>
    %c1 = arith.constant 1 : index
    %c0_9 = arith.constant 0 : index
    %c0_10 = arith.constant 0 : index
    %10 = vector.load %arg4[%c1, %c0_9, %c0_10] : memref<2x16x8xbf16, #tpu.memory_space<vmem>>, vector<1x16x8xbf16>
    %11 = vector.shape_cast %10 : vector<1x16x8xbf16> to vector<16x8xbf16>
    %12 = arith.truncf %6 : vector<128x16xf32> to vector<128x16xbf16>
    %13 = arith.extf %12 : vector<128x16xbf16> to vector<128x16xf32>
    %14 = arith.subf %6, %13 : vector<128x16xf32>
    %15 = arith.truncf %14 : vector<128x16xf32> to vector<128x16xbf16>
    %16 = arith.extf %15 : vector<128x16xbf16> to vector<128x16xf32>
    %17 = arith.subf %14, %16 : vector<128x16xf32>
    %18 = arith.truncf %17 : vector<128x16xf32> to vector<128x16xbf16>
    %19 = arith.truncf %7 : vector<128x16xf32> to vector<128x16xbf16>
    %20 = arith.extf %19 : vector<128x16xbf16> to vector<128x16xf32>
    %21 = arith.subf %7, %20 : vector<128x16xf32>
    %22 = arith.truncf %21 : vector<128x16xf32> to vector<128x16xbf16>
    %23 = arith.extf %22 : vector<128x16xbf16> to vector<128x16xf32>
    %24 = arith.subf %21, %23 : vector<128x16xf32>
    %25 = arith.truncf %24 : vector<128x16xf32> to vector<128x16xbf16>
    %cst = arith.constant dense<0.000000e+00> : vector<128x8xf32>
    %26 = tpu.matmul %12, %9, %cst {dimension_numbers = #tpu.dot_dimension_numbers<[1], [0], [0], [1], [0, 0, 1, 1], [], []>} : vector<128x16xbf16>, vector<16x8xbf16>, vector<128x8xf32> -> vector<128x8xf32>
    %cst_11 = arith.constant dense<0.000000e+00> : vector<128x8xf32>
    %27 = tpu.matmul %15, %9, %cst_11 {dimension_numbers = #tpu.dot_dimension_numbers<[1], [0], [0], [1], [0, 0, 1, 1], [], []>} : vector<128x16xbf16>, vector<16x8xbf16>, vector<128x8xf32> -> vector<128x8xf32>
    %28 = arith.addf %26, %27 : vector<128x8xf32>
    %cst_12 = arith.constant dense<0.000000e+00> : vector<128x8xf32>
    %29 = tpu.matmul %18, %9, %cst_12 {dimension_numbers = #tpu.dot_dimension_numbers<[1], [0], [0], [1], [0, 0, 1, 1], [], []>} : vector<128x16xbf16>, vector<16x8xbf16>, vector<128x8xf32> -> vector<128x8xf32>
    %30 = arith.addf %28, %29 : vector<128x8xf32>
    %cst_13 = arith.constant dense<0.000000e+00> : vector<128x8xf32>
    %31 = tpu.matmul %12, %11, %cst_13 {dimension_numbers = #tpu.dot_dimension_numbers<[1], [0], [0], [1], [0, 0, 1, 1], [], []>} : vector<128x16xbf16>, vector<16x8xbf16>, vector<128x8xf32> -> vector<128x8xf32>
    %cst_14 = arith.constant dense<0.000000e+00> : vector<128x8xf32>
    %32 = tpu.matmul %15, %11, %cst_14 {dimension_numbers = #tpu.dot_dimension_numbers<[1], [0], [0], [1], [0, 0, 1, 1], [], []>} : vector<128x16xbf16>, vector<16x8xbf16>, vector<128x8xf32> -> vector<128x8xf32>
    %33 = arith.addf %31, %32 : vector<128x8xf32>
    %cst_15 = arith.constant dense<0.000000e+00> : vector<128x8xf32>
    %34 = tpu.matmul %18, %11, %cst_15 {dimension_numbers = #tpu.dot_dimension_numbers<[1], [0], [0], [1], [0, 0, 1, 1], [], []>} : vector<128x16xbf16>, vector<16x8xbf16>, vector<128x8xf32> -> vector<128x8xf32>
    %35 = arith.addf %33, %34 : vector<128x8xf32>
    %cst_16 = arith.constant dense<0.000000e+00> : vector<128x8xf32>
    %36 = tpu.matmul %19, %9, %cst_16 {dimension_numbers = #tpu.dot_dimension_numbers<[1], [0], [0], [1], [0, 0, 1, 1], [], []>} : vector<128x16xbf16>, vector<16x8xbf16>, vector<128x8xf32> -> vector<128x8xf32>
    %cst_17 = arith.constant dense<0.000000e+00> : vector<128x8xf32>
    %37 = tpu.matmul %22, %9, %cst_17 {dimension_numbers = #tpu.dot_dimension_numbers<[1], [0], [0], [1], [0, 0, 1, 1], [], []>} : vector<128x16xbf16>, vector<16x8xbf16>, vector<128x8xf32> -> vector<128x8xf32>
    %38 = arith.addf %36, %37 : vector<128x8xf32>
    %cst_18 = arith.constant dense<0.000000e+00> : vector<128x8xf32>
    %39 = tpu.matmul %25, %9, %cst_18 {dimension_numbers = #tpu.dot_dimension_numbers<[1], [0], [0], [1], [0, 0, 1, 1], [], []>} : vector<128x16xbf16>, vector<16x8xbf16>, vector<128x8xf32> -> vector<128x8xf32>
    %40 = arith.addf %38, %39 : vector<128x8xf32>
    %cst_19 = arith.constant dense<0.000000e+00> : vector<128x8xf32>
    %41 = tpu.matmul %19, %11, %cst_19 {dimension_numbers = #tpu.dot_dimension_numbers<[1], [0], [0], [1], [0, 0, 1, 1], [], []>} : vector<128x16xbf16>, vector<16x8xbf16>, vector<128x8xf32> -> vector<128x8xf32>
    %cst_20 = arith.constant dense<0.000000e+00> : vector<128x8xf32>
    %42 = tpu.matmul %22, %11, %cst_20 {dimension_numbers = #tpu.dot_dimension_numbers<[1], [0], [0], [1], [0, 0, 1, 1], [], []>} : vector<128x16xbf16>, vector<16x8xbf16>, vector<128x8xf32> -> vector<128x8xf32>
    %43 = arith.addf %41, %42 : vector<128x8xf32>
    %cst_21 = arith.constant dense<0.000000e+00> : vector<128x8xf32>
    %44 = tpu.matmul %25, %11, %cst_21 {dimension_numbers = #tpu.dot_dimension_numbers<[1], [0], [0], [1], [0, 0, 1, 1], [], []>} : vector<128x16xbf16>, vector<16x8xbf16>, vector<128x8xf32> -> vector<128x8xf32>
    %45 = arith.addf %43, %44 : vector<128x8xf32>
    %46 = vector.shape_cast %30 : vector<128x8xf32> to vector<16x8x8xf32>
    %c0_22 = arith.constant 0 : index
    %c0_23 = arith.constant 0 : index
    %c0_24 = arith.constant 0 : index
    %c0_25 = arith.constant 0 : index
    %47 = vector.load %arg5[%c0_22, %c0_23, %c0_24, %c0_25] : memref<4x16x8x8xf32, #tpu.memory_space<vmem>>, vector<1x16x8x8xf32>
    %48 = vector.shape_cast %47 : vector<1x16x8x8xf32> to vector<16x8x8xf32>
    %49 = vector.shape_cast %46 : vector<16x8x8xf32> to vector<1x16x8x8xf32>
    tpu.vector_store %arg5[%c0_22, %c0_23, %c0_24, %c0_25], %49 {strides = array<i32>} : memref<4x16x8x8xf32, #tpu.memory_space<vmem>>, vector<1x16x8x8xf32>,
    %50 = vector.shape_cast %35 : vector<128x8xf32> to vector<16x8x8xf32>
    %c1_26 = arith.constant 1 : index
    %c0_27 = arith.constant 0 : index
    %c0_28 = arith.constant 0 : index
    %c0_29 = arith.constant 0 : index
    %51 = vector.load %arg5[%c1_26, %c0_27, %c0_28, %c0_29] : memref<4x16x8x8xf32, #tpu.memory_space<vmem>>, vector<1x16x8x8xf32>
    %52 = vector.shape_cast %51 : vector<1x16x8x8xf32> to vector<16x8x8xf32>
    %53 = vector.shape_cast %50 : vector<16x8x8xf32> to vector<1x16x8x8xf32>
    tpu.vector_store %arg5[%c1_26, %c0_27, %c0_28, %c0_29], %53 {strides = array<i32>} : memref<4x16x8x8xf32, #tpu.memory_space<vmem>>, vector<1x16x8x8xf32>,
    %54 = vector.shape_cast %40 : vector<128x8xf32> to vector<16x8x8xf32>
    %c2 = arith.constant 2 : index
    %c0_30 = arith.constant 0 : index
    %c0_31 = arith.constant 0 : index
    %c0_32 = arith.constant 0 : index
    %55 = vector.load %arg5[%c2, %c0_30, %c0_31, %c0_32] : memref<4x16x8x8xf32, #tpu.memory_space<vmem>>, vector<1x16x8x8xf32>
    %56 = vector.shape_cast %55 : vector<1x16x8x8xf32> to vector<16x8x8xf32>
    %57 = vector.shape_cast %54 : vector<16x8x8xf32> to vector<1x16x8x8xf32>
    tpu.vector_store %arg5[%c2, %c0_30, %c0_31, %c0_32], %57 {strides = array<i32>} : memref<4x16x8x8xf32, #tpu.memory_space<vmem>>, vector<1x16x8x8xf32>,
    %58 = vector.shape_cast %45 : vector<128x8xf32> to vector<16x8x8xf32>
    %c3 = arith.constant 3 : index
    %c0_33 = arith.constant 0 : index
    %c0_34 = arith.constant 0 : index
    %c0_35 = arith.constant 0 : index
    %59 = vector.load %arg5[%c3, %c0_33, %c0_34, %c0_35] : memref<4x16x8x8xf32, #tpu.memory_space<vmem>>, vector<1x16x8x8xf32>
    %60 = vector.shape_cast %59 : vector<1x16x8x8xf32> to vector<16x8x8xf32>
    %61 = vector.shape_cast %58 : vector<16x8x8xf32> to vector<1x16x8x8xf32>
    tpu.vector_store %arg5[%c3, %c0_33, %c0_34, %c0_35], %61 {strides = array<i32>} : memref<4x16x8x8xf32, #tpu.memory_space<vmem>>, vector<1x16x8x8xf32>,
    return
  }
  func.func @transform_0(%arg0: i32, %arg1: i32, %arg2: i32) -> (i32, i32, i32, i32) {
    %c0_i32 = arith.constant 0 : i32
    %c0_i32_0 = arith.constant 0 : i32
    return %arg0, %arg1, %arg2, %c0_i32 : i32, i32, i32, i32
  }
  func.func @transform_1(%arg0: i32, %arg1: i32, %arg2: i32) -> (i32, i32, i32) {
    %c0_i32 = arith.constant 0 : i32
    %c0_i32_0 = arith.constant 0 : i32
    %c0_i32_1 = arith.constant 0 : i32
    %c0_i32_2 = arith.constant 0 : i32
    return %c0_i32, %c0_i32_0, %c0_i32_1 : i32, i32, i32
  }
  func.func @transform_2(%arg0: i32, %arg1: i32, %arg2: i32) -> (i32, i32, i32, i32) {
    %c0_i32 = arith.constant 0 : i32
    %c0_i32_0 = arith.constant 0 : i32
    return %arg0, %arg1, %arg2, %c0_i32 : i32, i32, i32, i32
  }
}

</mosaic_0001>

<llo_original>
// kernel: dwt3d_forward.1
$region0: #{dwt3d_forward.1}
  #allocation0 [shape = 'u32[]', space=smem, size = 0x4, offset = 0x4, fixed_abs, tag = 'smem constant byte address 0x4 - core index']
  #allocation1 [shape = 'u32[144,128]{1,0:T(1,128)}', space=vmem, size = 0x12000, scoped, tag = 'internal scratch']
  %s0 = inlined_call_operand.vmem [shape: f32[2,32,8,32], index: 0, kind: input, shape index: {}]
  %s1 = inlined_call_operand.vmem [shape: bf16[2,16,8], index: 1, kind: input, shape index: {}]
  %s2 = inlined_call_operand.vmem [shape: f32[8,32,8,8], index: 2, kind: output, shape index: {}]
  %s3 = sld [smem:[#allocation0]]
  $region75: #{dwt3d_forward.1} parent=0
    _
  %s5 = ssub.s32 1, %s3
  %s6 = scalar_select 0, %s5, %s3
  $region1: #{dwt3d_forward.1} parent=0
    #allocation2 [shape = 'u8[524288]{0}', space=vmem, size = 0x80000, scoped, tag = 'output window, operand 0']
    loop: start=0, step=1, limit=6
    $region2: #{dwt3d_forward.1} parent=1 // loop_pre_header
      _
    $region3: #{dwt3d_forward.1} parent=1 // loop_header
      %s8 = sphi 0, %s12
      %p9 = scmp.ge.s32.totalorder %s8, 6
      %s15 = sphi 0, %s34
      %s16 = sphi 0, %s30
      %s17 = sphi 0, %s26
      %s18 = sphi 0, %s15
      %s19 = sphi 0, %s16
      %s20 = sphi 0, %s17
      %s21 = sphi 0, %s18
      %s22 = sphi 0, %s19
      %s23 = sphi 0, %s20
      %s41 = sphi 0, %s43
      %s44 = sphi 0, %s41
      %s45 = sphi 0, %s44
      %s61 = sphi 0, %s45
      %s65 = sphi 0, %s65
      %s67 = sphi 0, %s65
      %s68 = sphi 0, %s67
      %s82 = sphi 0, %s68
      %s92 = sphi 0, %s94
      %s95 = sphi 0, %s92
      %s96 = sphi 0, %s95
      %s112 = sphi 0, %s96
    $region4: #{dwt3d_forward.1} parent=1 // loop_header_branch
      %11 = sbr.rel (%p9) target = $region8
    $region5: #{dwt3d_forward.1} parent=1 // loop_body
      %s13 = ssub.s32 %s8, 1
      %s14 = ssub.s32 %s8, 2
      %s24 = sadd.s32 1, %s17
      %p25 = scmp.ge.s32.totalorder %s24, 1
      %s26 = scalar_select %p25, 0, %s24
      %s27 = sadd.s32 1, %s16
      %s28 = scalar_select %p25, %s27, %s16
      %p29 = scmp.ge.s32.totalorder %s28, 2
      %s30 = scalar_select %p29, 0, %s28
      %s31 = sadd.s32 1, %s15
      %s32 = scalar_select %p29, %s31, %s15
      %p33 = scmp.ge.s32.totalorder %s32, 2
      %s34 = scalar_select %p33, 0, %s32
      %s35 = ssub.s32 %s15, %s34
      %s36 = ssub.s32 %s16, %s30
      %s37 = sor.u32 %s35, %s36
      %s38 = ssub.s32 %s17, %s26
      %s39 = sor.u32 %s37, %s38
      %p40 = scmp.eq.s32.totalorder %s39, 0
      %s42 = sadd.s32 %s41, 1
      %s43 = scalar_select %p40, %s41, %s42
      %p46 = pneg %p40
      %p47 = scmp.eq.s32.totalorder %s8, 3
      %p48 = por %p46, %p47
      %p49 = scmp.ne.s32.totalorder %s41, %s44
      %p50 = scmp.eq.s32.totalorder %s8, 0
      %p51 = por %p49, %p50
      %p52 = scmp.ne.s32.totalorder %s41, %s44
      %p53 = scmp.eq.s32.totalorder %s13, 3
      %p54 = por %p52, %p53
      %p55 = scmp.ne.s32.totalorder %s44, %s45
      %p56 = scmp.eq.s32.totalorder %s13, 0
      %p57 = por %p55, %p56
      %p58 = scmp.ne.s32.totalorder %s44, %s45
      %p59 = scmp.eq.s32.totalorder %s14, 3
      %p60 = por %p58, %p59
      %p62 = scmp.ne.s32.totalorder %s45, %s61
      %p63 = scmp.eq.s32.totalorder %s14, 0
      %p64 = por %p62, %p63
      %s66 = sadd.s32 %s65, 1
      %p69 = scmp.eq.s32.totalorder %s8, 3
      %p70 = scmp.ne.s32.totalorder %s65, %s67
      %p71 = scmp.eq.s32.totalorder %s8, 0
      %p72 = por %p70, %p71
      %p73 = scmp.ne.s32.totalorder %s65, %s67
      %p74 = scmp.eq.s32.totalorder %s13, 3
      %p75 = por %p73, %p74
      %p76 = scmp.ne.s32.totalorder %s67, %s68
      %p77 = scmp.eq.s32.totalorder %s13, 0
      %p78 = por %p76, %p77
      %p79 = scmp.ne.s32.totalorder %s67, %s68
      %p80 = scmp.eq.s32.totalorder %s14, 3
      %p81 = por %p79, %p80
      %p83 = scmp.ne.s32.totalorder %s68, %s82
      %p84 = scmp.eq.s32.totalorder %s14, 0
      %p85 = por %p83, %p84
      %s86 = ssub.s32 %s15, %s34
      %s87 = ssub.s32 %s16, %s30
      %s88 = sor.u32 %s86, %s87
      %s89 = ssub.s32 %s17, %s26
      %s90 = sor.u32 %s88, %s89
      %p91 = scmp.eq.s32.totalorder %s90, 0
      %s93 = sadd.s32 %s92, 1
      %s94 = scalar_select %p91, %s92, %s93
      %p97 = pneg %p91
      %p98 = scmp.eq.s32.totalorder %s8, 3
      %p99 = por %p97, %p98
      %p100 = scmp.ne.s32.totalorder %s92, %s95
      %p101 = scmp.eq.s32.totalorder %s8, 0
      %p102 = por %p100, %p101
      %p103 = scmp.ne.s32.totalorder %s92, %s95
      %p104 = scmp.eq.s32.totalorder %s13, 3
      %p105 = por %p103, %p104
      %p106 = scmp.ne.s32.totalorder %s95, %s96
      %p107 = scmp.eq.s32.totalorder %s13, 0
      %p108 = por %p106, %p107
      %p109 = scmp.ne.s32.totalorder %s95, %s96
      %p110 = scmp.eq.s32.totalorder %s14, 3
      %p111 = por %p109, %p110
      %p113 = scmp.ne.s32.totalorder %s96, %s112
      %p114 = scmp.eq.s32.totalorder %s14, 0
      %p115 = por %p113, %p114
      %p116 = scmp.le.s32.totalorder 1, %s8
      %p117 = scmp.lt.s32.totalorder %s8, 5
      %p118 = pnand %p116, %p117
      %p119 = pneg %p118
      // Predicated region
      $region9: #{dwt3d_forward.1} parent=5 // pred_check
        _
      $region10: #{dwt3d_forward.1} parent=5 // pred_check_branch
        %121 = sbr.rel (%p118) target = $region12
      $region11: #{dwt3d_forward.1} parent=5 // pred_region
        %s122 = ssub.s32 %s8, 1
        // Predicated region
        $region13: #{dwt3d_forward.1} parent=11 // pred_check
          %p123 = pneg %p78
        $region14: #{dwt3d_forward.1} parent=11 // pred_check_branch
          %125 = sbr.rel (%p123) target = $region16
        $region15: #{dwt3d_forward.1} parent=11 // pred_region
          _
        $region16: #{dwt3d_forward.1} parent=11 // pred_fallthru
          _
      $region12: #{dwt3d_forward.1} parent=5 // pred_fallthru
        _
      %p126 = scmp.lt.s32.totalorder %s8, 4
      // Predicated region
      $region17: #{dwt3d_forward.1} parent=5 // pred_check
        %p127 = pneg %p126
      $region18: #{dwt3d_forward.1} parent=5 // pred_check_branch
        %129 = sbr.rel (%p127) target = $region20
      $region19: #{dwt3d_forward.1} parent=5 // pred_region
        // Predicated region
        $region21: #{dwt3d_forward.1} parent=19 // pred_check
          %p130 = pneg %p51
        $region22: #{dwt3d_forward.1} parent=19 // pred_check_branch
          %132 = sbr.rel (%p130) target = $region24
        $region23: #{dwt3d_forward.1} parent=19 // pred_region
          %s133 = smul.u32 16, %s16
          %p134 = scmp.lt.s32.totalorder %s15, 1
          %s135 = scalar_select %p134, %s15, 1
          %p136 = scmp.lt.s32.totalorder %s133, 31
          %s137 = scalar_select %p136, %s133, 31
          %p138 = scmp.lt.s32.totalorder %s17, 0
          %s139 = scalar_select %p138, %s17, 0
          %s140 = sadd.s32 %s139, %s137
          %s141 = smul.addr %s135, 32
          %s142 = sadd.s32 %s140, %s141
          %s143 = smul.addr %s142, 8
          %s144 = scalar_lea.vmem %s0, %s143
          %s145 = smul.u32 16, %s16
        $region24: #{dwt3d_forward.1} parent=19 // pred_fallthru
          _
      $region20: #{dwt3d_forward.1} parent=5 // pred_fallthru
        _
      %p146 = scmp.le.s32.totalorder 1, %s8
      %p147 = scmp.lt.s32.totalorder %s8, 5
      %p148 = pnand %p146, %p147
      %p149 = pneg %p148
      // Predicated region
      $region25: #{dwt3d_forward.1} parent=5 // pred_check
        _
      $region26: #{dwt3d_forward.1} parent=5 // pred_check_branch
        %151 = sbr.rel (%p148) target = $region28
      $region27: #{dwt3d_forward.1} parent=5 // pred_region
        %s152 = ssub.s32 %s8, 1
        %s153 = smul.u32 16, %s19
        %p154 = scmp.lt.s32.totalorder %s18, 1
        %s155 = scalar_select %p154, %s18, 1
        %p156 = scmp.lt.s32.totalorder %s153, 31
        %s157 = scalar_select %p156, %s153, 31
        %p158 = scmp.lt.s32.totalorder %s20, 0
        %s159 = scalar_select %p158, %s20, 0
        %s160 = sadd.s32 %s159, %s157
        %s161 = smul.addr %s155, 32
        %s162 = sadd.s32 %s160, %s161
        %s163 = smul.addr %s162, 8
        %s164 = scalar_lea.vmem %s0, %s163
        %p165 = pneg %p57
        %p166 = pneg %p54
        %p167 = pneg %p78
        %p168 = pneg %p75
        %p169 = pneg %p108
        %p170 = pneg %p105
        %s171 = sand.u32 %s95, 1
        %s172 = sand.u32 %s95, 1
        %s173 = smul.addr %s172, 512
        %s174 = scalar_lea.vmem [#allocation2], %s173
        %s175 = smul.u32 16, %s19
        %p176 = scmp.lt.s32.totalorder %s18, 1
        %s177 = scalar_select %p176, %s18, 1
        %p178 = scmp.lt.s32.totalorder %s175, 31
        %s179 = scalar_select %p178, %s175, 31
        %p180 = scmp.lt.s32.totalorder %s20, 0
        %s181 = scalar_select %p180, %s20, 0
        %s182 = sadd.s32 %s181, %s179
        %s183 = smul.addr %s177, 32
        %s184 = sadd.s32 %s182, %s183
        %s185 = smul.addr %s184, 8
        %s186 = scalar_lea.vmem %s0, %s185
        %s187 = smul.u32 16, %s19
        %s188 = smul.u32 4, %s18
        %s189 = smul.u32 16, %s19
        %v191 = vld [vmem:[%s186] sm:$0xff]
        %v192 = vld [vmem:[%s186 + $0x8] sm:$0xff]
        %v193 = vld [vmem:[%s186 + $0x10] sm:$0xff]
        %v194 = vld [vmem:[%s186 + $0x18] sm:$0xff]
        %v195 = vld [vmem:[%s186 + $0x20] sm:$0xff]
        %v196 = vld [vmem:[%s186 + $0x28] sm:$0xff]
        %v197 = vld [vmem:[%s186 + $0x30] sm:$0xff]
        %v198 = vld [vmem:[%s186 + $0x38] sm:$0xff]
        %v199 = vld [vmem:[%s186 + $0x40] sm:$0xff]
        %v200 = vld [vmem:[%s186 + $0x48] sm:$0xff]
        %v201 = vld [vmem:[%s186 + $0x50] sm:$0xff]
        %v202 = vld [vmem:[%s186 + $0x58] sm:$0xff]
        %v203 = vld [vmem:[%s186 + $0x60] sm:$0xff]
        %v204 = vld [vmem:[%s186 + $0x68] sm:$0xff]
        %v205 = vld [vmem:[%s186 + $0x70] sm:$0xff]
        %v206 = vld [vmem:[%s186 + $0x78] sm:$0xff]
        %223 = vrot.lane.b32.xlu0 %v191, 112
        %v224 = vpop.permute.xlu0 %223
        %225 = vrot.lane.b32.xlu0 %v192, 112
        %v226 = vpop.permute.xlu0 %225
        %227 = vrot.lane.b32.xlu0 %v193, 112
        %v228 = vpop.permute.xlu0 %227
        %229 = vrot.lane.b32.xlu0 %v194, 112
        %v230 = vpop.permute.xlu0 %229
        %231 = vrot.lane.b32.xlu0 %v195, 112
        %v232 = vpop.permute.xlu0 %231
        %233 = vrot.lane.b32.xlu0 %v196, 112
        %v234 = vpop.permute.xlu0 %233
        %235 = vrot.lane.b32.xlu0 %v197, 112
        %v236 = vpop.permute.xlu0 %235
        %237 = vrot.lane.b32.xlu0 %v198, 112
        %v238 = vpop.permute.xlu0 %237
        %239 = vrot.lane.b32.xlu0 %v199, 112
        %v240 = vpop.permute.xlu0 %239
        %241 = vrot.lane.b32.xlu0 %v200, 112
        %v242 = vpop.permute.xlu0 %241
        %243 = vrot.lane.b32.xlu0 %v201, 112
        %v244 = vpop.permute.xlu0 %243
        %245 = vrot.lane.b32.xlu0 %v202, 112
        %v246 = vpop.permute.xlu0 %245
        %247 = vrot.lane.b32.xlu0 %v203, 112
        %v248 = vpop.permute.xlu0 %247
        %249 = vrot.lane.b32.xlu0 %v204, 112
        %v250 = vpop.permute.xlu0 %249
        %251 = vrot.lane.b32.xlu0 %v205, 112
        %v252 = vpop.permute.xlu0 %251
        %253 = vrot.lane.b32.xlu0 %v206, 112
        %v254 = vpop.permute.xlu0 %253
        %v271 = vadd.f32 %v191, %v224
        %v272 = vadd.f32 %v192, %v226
        %v273 = vadd.f32 %v193, %v228
        %v274 = vadd.f32 %v194, %v230
        %v275 = vadd.f32 %v195, %v232
        %v276 = vadd.f32 %v196, %v234
        %v277 = vadd.f32 %v197, %v236
        %v278 = vadd.f32 %v198, %v238
        %v279 = vadd.f32 %v199, %v240
        %v280 = vadd.f32 %v200, %v242
        %v281 = vadd.f32 %v201, %v244
        %v282 = vadd.f32 %v202, %v246
        %v283 = vadd.f32 %v203, %v248
        %v284 = vadd.f32 %v204, %v250
        %v285 = vadd.f32 %v205, %v252
        %v286 = vadd.f32 %v206, %v254
        %287 = vrot.lane.b32.xlu0 %v191, 16
        %v288 = vpop.permute.xlu0 %287
        %289 = vrot.lane.b32.xlu0 %v192, 16
        %v290 = vpop.permute.xlu0 %289
        %291 = vrot.lane.b32.xlu0 %v193, 16
        %v292 = vpop.permute.xlu0 %291
        %293 = vrot.lane.b32.xlu0 %v194, 16
        %v294 = vpop.permute.xlu0 %293
        %295 = vrot.lane.b32.xlu0 %v195, 16
        %v296 = vpop.permute.xlu0 %295
        %297 = vrot.lane.b32.xlu0 %v196, 16
        %v298 = vpop.permute.xlu0 %297
        %299 = vrot.lane.b32.xlu0 %v197, 16
        %v300 = vpop.permute.xlu0 %299
        %301 = vrot.lane.b32.xlu0 %v198, 16
        %v302 = vpop.permute.xlu0 %301
        %303 = vrot.lane.b32.xlu0 %v199, 16
        %v304 = vpop.permute.xlu0 %303
        %305 = vrot.lane.b32.xlu0 %v200, 16
        %v306 = vpop.permute.xlu0 %305
        %307 = vrot.lane.b32.xlu0 %v201, 16
        %v308 = vpop.permute.xlu0 %307
        %309 = vrot.lane.b32.xlu0 %v202, 16
        %v310 = vpop.permute.xlu0 %309
        %311 = vrot.lane.b32.xlu0 %v203, 16
        %v312 = vpop.permute.xlu0 %311
        %313 = vrot.lane.b32.xlu0 %v204, 16
        %v314 = vpop.permute.xlu0 %313
        %315 = vrot.lane.b32.xlu0 %v205, 16
        %v316 = vpop.permute.xlu0 %315
        %317 = vrot.lane.b32.xlu0 %v206, 16
        %v318 = vpop.permute.xlu0 %317
        %v335 = vsub.f32 %v191, %v288
        %v336 = vsub.f32 %v192, %v290
        %v337 = vsub.f32 %v193, %v292
        %v338 = vsub.f32 %v194, %v294
        %v339 = vsub.f32 %v195, %v296
        %v340 = vsub.f32 %v196, %v298
        %v341 = vsub.f32 %v197, %v300
        %v342 = vsub.f32 %v198, %v302
        %v343 = vsub.f32 %v199, %v304
        %v344 = vsub.f32 %v200, %v306
        %v345 = vsub.f32 %v201, %v308
        %v346 = vsub.f32 %v202, %v310
        %v347 = vsub.f32 %v203, %v312
        %v348 = vsub.f32 %v204, %v314
        %v349 = vsub.f32 %v205, %v316
        %v350 = vsub.f32 %v206, %v318
        %v351 = vld [vmem:[%s1] sm:$0xf]
        %v352 = vld [vmem:[%s1 + $0x4] sm:$0xf]
        %s353 = scalar_lea.vmem %s1, 8
        %v354 = vld [vmem:[%s353] sm:$0xf]
        %v355 = vld [vmem:[%s353 + $0x4] sm:$0xf]
        %v356 = vpack.c.bf16 %v272, %v271
        %v357 = vpack.c.bf16 %v274, %v273
        %v358 = vpack.c.bf16 %v276, %v275
        %v359 = vpack.c.bf16 %v278, %v277
        %v360 = vpack.c.bf16 %v280, %v279
        %v361 = vpack.c.bf16 %v282, %v281
        %v362 = vpack.c.bf16 %v284, %v283
        %v363 = vpack.c.bf16 %v286, %v285
        %v364 = vunpack.c.l.bf16 %v356
        %v365 = vunpack.c.h.bf16 %v356
        %v366 = vunpack.c.l.bf16 %v357
        %v367 = vunpack.c.h.bf16 %v357
        %v368 = vunpack.c.l.bf16 %v358
        %v369 = vunpack.c.h.bf16 %v358
        %v370 = vunpack.c.l.bf16 %v359
        %v371 = vunpack.c.h.bf16 %v359
        %v372 = vunpack.c.l.bf16 %v360
        %v373 = vunpack.c.h.bf16 %v360
        %v374 = vunpack.c.l.bf16 %v361
        %v375 = vunpack.c.h.bf16 %v361
        %v376 = vunpack.c.l.bf16 %v362
        %v377 = vunpack.c.h.bf16 %v362
        %v378 = vunpack.c.l.bf16 %v363
        %v379 = vunpack.c.h.bf16 %v363
        %v380 = vsub.f32 %v271, %v364
        %v381 = vsub.f32 %v272, %v365
        %v382 = vsub.f32 %v273, %v366
        %v383 = vsub.f32 %v274, %v367
        %v384 = vsub.f32 %v275, %v368
        %v385 = vsub.f32 %v276, %v369
        %v386 = vsub.f32 %v277, %v370
        %v387 = vsub.f32 %v278, %v371
        %v388 = vsub.f32 %v279, %v372
        %v389 = vsub.f32 %v280, %v373
        %v390 = vsub.f32 %v281, %v374
        %v391 = vsub.f32 %v282, %v375
        %v392 = vsub.f32 %v283, %v376
        %v393 = vsub.f32 %v284, %v377
        %v394 = vsub.f32 %v285, %v378
        %v395 = vsub.f32 %v286, %v379
        %v396 = vpack.c.bf16 %v381, %v380
        %v397 = vpack.c.bf16 %v383, %v382
        %v398 = vpack.c.bf16 %v385, %v384
        %v399 = vpack.c.bf16 %v387, %v386
        %v400 = vpack.c.bf16 %v389, %v388
        %v401 = vpack.c.bf16 %v391, %v390
        %v402 = vpack.c.bf16 %v393, %v392
        %v403 = vpack.c.bf16 %v395, %v394
        %v404 = vunpack.c.l.bf16 %v396
        %v405 = vunpack.c.h.bf16 %v396
        %v406 = vunpack.c.l.bf16 %v397
        %v407 = vunpack.c.h.bf16 %v397
        %v408 = vunpack.c.l.bf16 %v398
        %v409 = vunpack.c.h.bf16 %v398
        %v410 = vunpack.c.l.bf16 %v399
        %v411 = vunpack.c.h.bf16 %v399
        %v412 = vunpack.c.l.bf16 %v400
        %v413 = vunpack.c.h.bf16 %v400
        %v414 = vunpack.c.l.bf16 %v401
        %v415 = vunpack.c.h.bf16 %v401
        %v416 = vunpack.c.l.bf16 %v402
        %v417 = vunpack.c.h.bf16 %v402
        %v418 = vunpack.c.l.bf16 %v403
        %v419 = vunpack.c.h.bf16 %v403
        %v420 = vsub.f32 %v380, %v404
        %v421 = vsub.f32 %v381, %v405
        %v422 = vsub.f32 %v382, %v406
        %v423 = vsub.f32 %v383, %v407
        %v424 = vsub.f32 %v384, %v408
        %v425 = vsub.f32 %v385, %v409
        %v426 = vsub.f32 %v386, %v410
        %v427 = vsub.f32 %v387, %v411
        %v428 = vsub.f32 %v388, %v412
        %v429 = vsub.f32 %v389, %v413
        %v430 = vsub.f32 %v390, %v414
        %v431 = vsub.f32 %v391, %v415
        %v432 = vsub.f32 %v392, %v416
        %v433 = vsub.f32 %v393, %v417
        %v434 = vsub.f32 %v394, %v418
        %v435 = vsub.f32 %v395, %v419
        %v436 = vpack.c.bf16 %v421, %v420
        %v437 = vpack.c.bf16 %v423, %v422
        %v438 = vpack.c.bf16 %v425, %v424
        %v439 = vpack.c.bf16 %v427, %v426
        %v440 = vpack.c.bf16 %v429, %v428
        %v441 = vpack.c.bf16 %v431, %v430
        %v442 = vpack.c.bf16 %v433, %v432
        %v443 = vpack.c.bf16 %v435, %v434
        %v444 = vpack.c.bf16 %v336, %v335
        %v445 = vpack.c.bf16 %v338, %v337
        %v446 = vpack.c.bf16 %v340, %v339
        %v447 = vpack.c.bf16 %v342, %v341
        %v448 = vpack.c.bf16 %v344, %v343
        %v449 = vpack.c.bf16 %v346, %v345
        %v450 = vpack.c.bf16 %v348, %v347
        %v451 = vpack.c.bf16 %v350, %v349
        %v452 = vunpack.c.l.bf16 %v444
        %v453 = vunpack.c.h.bf16 %v444
        %v454 = vunpack.c.l.bf16 %v445
        %v455 = vunpack.c.h.bf16 %v445
        %v456 = vunpack.c.l.bf16 %v446
        %v457 = vunpack.c.h.bf16 %v446
        %v458 = vunpack.c.l.bf16 %v447
        %v459 = vunpack.c.h.bf16 %v447
        %v460 = vunpack.c.l.bf16 %v448
        %v461 = vunpack.c.h.bf16 %v448
        %v462 = vunpack.c.l.bf16 %v449
        %v463 = vunpack.c.h.bf16 %v449
        %v464 = vunpack.c.l.bf16 %v450
        %v465 = vunpack.c.h.bf16 %v450
        %v466 = vunpack.c.l.bf16 %v451
        %v467 = vunpack.c.h.bf16 %v451
        %v468 = vsub.f32 %v335, %v452
        %v469 = vsub.f32 %v336, %v453
        %v470 = vsub.f32 %v337, %v454
        %v471 = vsub.f32 %v338, %v455
        %v472 = vsub.f32 %v339, %v456
        %v473 = vsub.f32 %v340, %v457
        %v474 = vsub.f32 %v341, %v458
        %v475 = vsub.f32 %v342, %v459
        %v476 = vsub.f32 %v343, %v460
        %v477 = vsub.f32 %v344, %v461
        %v478 = vsub.f32 %v345, %v462
        %v479 = vsub.f32 %v346, %v463
        %v480 = vsub.f32 %v347, %v464
        %v481 = vsub.f32 %v348, %v465
        %v482 = vsub.f32 %v349, %v466
        %v483 = vsub.f32 %v350, %v467
        %v484 = vpack.c.bf16 %v469, %v468
        %v485 = vpack.c.bf16 %v471, %v470
        %v486 = vpack.c.bf16 %v473, %v472
        %v487 = vpack.c.bf16 %v475, %v474
        %v488 = vpack.c.bf16 %v477, %v476
        %v489 = vpack.c.bf16 %v479, %v478
        %v490 = vpack.c.bf16 %v481, %v480
        %v491 = vpack.c.bf16 %v483, %v482
        %v492 = vunpack.c.l.bf16 %v484
        %v493 = vunpack.c.h.bf16 %v484
        %v494 = vunpack.c.l.bf16 %v485
        %v495 = vunpack.c.h.bf16 %v485
        %v496 = vunpack.c.l.bf16 %v486
        %v497 = vunpack.c.h.bf16 %v486
        %v498 = vunpack.c.l.bf16 %v487
        %v499 = vunpack.c.h.bf16 %v487
        %v500 = vunpack.c.l.bf16 %v488
        %v501 = vunpack.c.h.bf16 %v488
        %v502 = vunpack.c.l.bf16 %v489
        %v503 = vunpack.c.h.bf16 %v489
        %v504 = vunpack.c.l.bf16 %v490
        %v505 = vunpack.c.h.bf16 %v490
        %v506 = vunpack.c.l.bf16 %v491
        %v507 = vunpack.c.h.bf16 %v491
        %v508 = vsub.f32 %v468, %v492
        %v509 = vsub.f32 %v469, %v493
        %v510 = vsub.f32 %v470, %v494
        %v511 = vsub.f32 %v471, %v495
        %v512 = vsub.f32 %v472, %v496
        %v513 = vsub.f32 %v473, %v497
        %v514 = vsub.f32 %v474, %v498
        %v515 = vsub.f32 %v475, %v499
        %v516 = vsub.f32 %v476, %v500
        %v517 = vsub.f32 %v477, %v501
        %v518 = vsub.f32 %v478, %v502
        %v519 = vsub.f32 %v479, %v503
        %v520 = vsub.f32 %v480, %v504
        %v521 = vsub.f32 %v481, %v505
        %v522 = vsub.f32 %v482, %v506
        %v523 = vsub.f32 %v483, %v507
        %v524 = vpack.c.bf16 %v509, %v508
        %v525 = vpack.c.bf16 %v511, %v510
        %v526 = vpack.c.bf16 %v513, %v512
        %v527 = vpack.c.bf16 %v515, %v514
        %v528 = vpack.c.bf16 %v517, %v516
        %v529 = vpack.c.bf16 %v519, %v518
        %v530 = vpack.c.bf16 %v521, %v520
        %v531 = vpack.c.bf16 %v523, %v522
        %v534 = vunpack.c.l.b16 %v351
        %v535 = vunpack.c.l.b16 %v352
        %v536 = vpack.c.b16 %v535, %v534
        %vm538 = vcmask 130048
        %v540 = vsel %vm538, %v396, 0
        %v543 = vsel %vm538, %v397, 0
        %v546 = vsel %vm538, %v398, 0
        %v549 = vsel %vm538, %v399, 0
        %v552 = vsel %vm538, %v400, 0
        %v555 = vsel %vm538, %v401, 0
        %v558 = vsel %vm538, %v402, 0
        %v561 = vsel %vm538, %v403, 0
        %563 = vmatprep.subr.bf16.mxu0 0
        %564 = vmatpush1.bf16.msra.mxu0 0
        %565 = vmatprep.subr.bf16.mxu0 0
        %566 = vmatpush1.bf16.msra.mxu0 0
        %567 = vmatprep.subr.bf16.mxu0 0
        %568 = vmatpush1.bf16.msra.mxu0 0
        %569 = vmatprep.subr.bf16.mxu0 0
        %570 = vmatpush1.bf16.msra.mxu0 0
        %571 = vmatprep.subr.bf16.mxu0 0
        %572 = vmatpush1.bf16.msra.mxu0 0
        %573 = vmatprep.subr.bf16.mxu0 0
        %574 = vmatpush1.bf16.msra.mxu0 0
        %575 = vmatprep.subr.bf16.mxu0 0
        %576 = vmatpush1.bf16.msra.mxu0 0
        %577 = vmatprep.subr.bf16.mxu0 0
        %578 = vmatpush1.bf16.msra.mxu0 %v536
        %579 = vmatprep.subr.bf16.mxu0 0
        %580 = vmatpush2.bf16.msra.mxu0 0
        %581 = vmatprep.subr.bf16.mxu0 0
        %582 = vmatpush2.bf16.msra.mxu0 0
        %583 = vmatprep.subr.bf16.mxu0 0
        %584 = vmatpush2.bf16.msra.mxu0 0
        %585 = vmatprep.subr.bf16.mxu0 0
        %586 = vmatpush2.bf16.msra.mxu0 0
        %587 = vmatprep.subr.bf16.mxu0 0
        %588 = vmatpush2.bf16.msra.mxu0 0
        %589 = vmatprep.subr.bf16.mxu0 0
        %590 = vmatpush2.bf16.msra.mxu0 0
        %591 = vmatprep.subr.bf16.mxu0 0
        %592 = vmatpush2.bf16.msra.mxu0 0
        %593 = vmatprep.subr.bf16.mxu0 0
        %594 = vmatpush2.bf16.msra.mxu0 0
        %595 = vmatprep.mubr.bf16.mxu0 0
        %596 = vmatmul.mubr.bf16.gmra.mxu0 %v540
        %v597 = vpop.f32.mrf.mxu0
        %v598 = vadd.f32 0.0, %v597
        %v599 = vpop.f32.mrf.mxu0
        %v600 = vpop.f32.mrf.mxu0
        %v601 = vadd.f32 0.0, %v600
        %v602 = vpop.f32.mrf.mxu0
        %603 = vmatprep.mubr.bf16.mxu0 0
        %604 = vmatmul.mubr.bf16.gmra.mxu0 %v543
        %v605 = vpop.f32.mrf.mxu0
        %v606 = vadd.f32 0.0, %v605
        %v607 = vpop.f32.mrf.mxu0
        %v608 = vpop.f32.mrf.mxu0
        %v609 = vadd.f32 0.0, %v608
        %v610 = vpop.f32.mrf.mxu0
        %611 = vmatprep.mubr.bf16.mxu0 0
        %612 = vmatmul.mubr.bf16.gmra.mxu0 %v546
        %v613 = vpop.f32.mrf.mxu0
        %v614 = vadd.f32 0.0, %v613
        %v615 = vpop.f32.mrf.mxu0
        %v616 = vpop.f32.mrf.mxu0
        %v617 = vadd.f32 0.0, %v616
        %v618 = vpop.f32.mrf.mxu0
        %619 = vmatprep.mubr.bf16.mxu0 0
        %620 = vmatmul.mubr.bf16.gmra.mxu0 %v549
        %v621 = vpop.f32.mrf.mxu0
        %v622 = vadd.f32 0.0, %v621
        %v623 = vpop.f32.mrf.mxu0
        %v624 = vpop.f32.mrf.mxu0
        %v625 = vadd.f32 0.0, %v624
        %v626 = vpop.f32.mrf.mxu0
        %627 = vmatprep.mubr.bf16.mxu0 0
        %628 = vmatmul.mubr.bf16.gmra.mxu0 %v552
        %v629 = vpop.f32.mrf.mxu0
        %v630 = vadd.f32 0.0, %v629
        %v631 = vpop.f32.mrf.mxu0
        %v632 = vpop.f32.mrf.mxu0
        %v633 = vadd.f32 0.0, %v632
        %v634 = vpop.f32.mrf.mxu0
        %635 = vmatprep.mubr.bf16.mxu0 0
        %636 = vmatmul.mubr.bf16.gmra.mxu0 %v555
        %v637 = vpop.f32.mrf.mxu0
        %v638 = vadd.f32 0.0, %v637
        %v639 = vpop.f32.mrf.mxu0
        %v640 = vpop.f32.mrf.mxu0
        %v641 = vadd.f32 0.0, %v640
        %v642 = vpop.f32.mrf.mxu0
        %643 = vmatprep.mubr.bf16.mxu0 0
        %644 = vmatmul.mubr.bf16.gmra.mxu0 %v558
        %v645 = vpop.f32.mrf.mxu0
        %v646 = vadd.f32 0.0, %v645
        %v647 = vpop.f32.mrf.mxu0
        %v648 = vpop.f32.mrf.mxu0
        %v649 = vadd.f32 0.0, %v648
        %v650 = vpop.f32.mrf.mxu0
        %651 = vmatprep.mubr.bf16.mxu0 0
        %652 = vmatmul.mubr.bf16.gmra.mxu0 %v561
        %v653 = vpop.f32.mrf.mxu0
        %v654 = vadd.f32 0.0, %v653
        %v655 = vpop.f32.mrf.mxu0
        %v656 = vpop.f32.mrf.mxu0
        %v657 = vadd.f32 0.0, %v656
        %v658 = vpop.f32.mrf.mxu0
        %659 = vdwg.mxu0
        %v661 = vsel %vm538, %v356, 0
        %v664 = vsel %vm538, %v357, 0
        %v667 = vsel %vm538, %v358, 0
        %v670 = vsel %vm538, %v359, 0
        %v673 = vsel %vm538, %v360, 0
        %v676 = vsel %vm538, %v361, 0
        %v679 = vsel %vm538, %v362, 0
        %v682 = vsel %vm538, %v363, 0
        %684 = vmatprep.subr.bf16.mxu0 0
        %685 = vmatpush1.bf16.msra.mxu0 0
        %686 = vmatprep.subr.bf16.mxu0 0
        %687 = vmatpush1.bf16.msra.mxu0 0
        %688 = vmatprep.subr.bf16.mxu0 0
        %689 = vmatpush1.bf16.msra.mxu0 0
        %690 = vmatprep.subr.bf16.mxu0 0
        %691 = vmatpush1.bf16.msra.mxu0 0
        %692 = vmatprep.subr.bf16.mxu0 0
        %693 = vmatpush1.bf16.msra.mxu0 0
        %694 = vmatprep.subr.bf16.mxu0 0
        %695 = vmatpush1.bf16.msra.mxu0 0
        %696 = vmatprep.subr.bf16.mxu0 0
        %697 = vmatpush1.bf16.msra.mxu0 0
        %698 = vmatprep.subr.bf16.mxu0 0
        %699 = vmatpush1.bf16.msra.mxu0 %v536
        %700 = vmatprep.subr.bf16.mxu0 0
        %701 = vmatpush2.bf16.msra.mxu0 0
        %702 = vmatprep.subr.bf16.mxu0 0
        %703 = vmatpush2.bf16.msra.mxu0 0
        %704 = vmatprep.subr.bf16.mxu0 0
        %705 = vmatpush2.bf16.msra.mxu0 0
        %706 = vmatprep.subr.bf16.mxu0 0
        %707 = vmatpush2.bf16.msra.mxu0 0
        %708 = vmatprep.subr.bf16.mxu0 0
        %709 = vmatpush2.bf16.msra.mxu0 0
        %710 = vmatprep.subr.bf16.mxu0 0
        %711 = vmatpush2.bf16.msra.mxu0 0
        %712 = vmatprep.subr.bf16.mxu0 0
        %713 = vmatpush2.bf16.msra.mxu0 0
        %714 = vmatprep.subr.bf16.mxu0 0
        %715 = vmatpush2.bf16.msra.mxu0 0
        %716 = vmatprep.mubr.bf16.mxu0 0
        %717 = vmatmul.mubr.bf16.gmra.mxu0 %v661
        %v718 = vpop.f32.mrf.mxu0
        %v719 = vadd.f32 %v598, %v718
        %v720 = vpop.f32.mrf.mxu0
        %v721 = vpop.f32.mrf.mxu0
        %v722 = vadd.f32 %v601, %v721
        %v723 = vpop.f32.mrf.mxu0
        %724 = vmatprep.mubr.bf16.mxu0 0
        %725 = vmatmul.mubr.bf16.gmra.mxu0 %v664
        %v726 = vpop.f32.mrf.mxu0
        %v727 = vadd.f32 %v606, %v726
        %v728 = vpop.f32.mrf.mxu0
        %v729 = vpop.f32.mrf.mxu0
        %v730 = vadd.f32 %v609, %v729
        %v731 = vpop.f32.mrf.mxu0
        %732 = vmatprep.mubr.bf16.mxu0 0
        %733 = vmatmul.mubr.bf16.gmra.mxu0 %v667
        %v734 = vpop.f32.mrf.mxu0
        %v735 = vadd.f32 %v614, %v734
        %v736 = vpop.f32.mrf.mxu0
        %v737 = vpop.f32.mrf.mxu0
        %v738 = vadd.f32 %v617, %v737
        %v739 = vpop.f32.mrf.mxu0
        %740 = vmatprep.mubr.bf16.mxu0 0
        %741 = vmatmul.mubr.bf16.gmra.mxu0 %v670
        %v742 = vpop.f32.mrf.mxu0
        %v743 = vadd.f32 %v622, %v742
        %v744 = vpop.f32.mrf.mxu0
        %v745 = vpop.f32.mrf.mxu0
        %v746 = vadd.f32 %v625, %v745
        %v747 = vpop.f32.mrf.mxu0
        %748 = vmatprep.mubr.bf16.mxu0 0
        %749 = vmatmul.mubr.bf16.gmra.mxu0 %v673
        %v750 = vpop.f32.mrf.mxu0
        %v751 = vadd.f32 %v630, %v750
        %v752 = vpop.f32.mrf.mxu0
        %v753 = vpop.f32.mrf.mxu0
        %v754 = vadd.f32 %v633, %v753
        %v755 = vpop.f32.mrf.mxu0
        %756 = vmatprep.mubr.bf16.mxu0 0
        %757 = vmatmul.mubr.bf16.gmra.mxu0 %v676
        %v758 = vpop.f32.mrf.mxu0
        %v759 = vadd.f32 %v638, %v758
        %v760 = vpop.f32.mrf.mxu0
        %v761 = vpop.f32.mrf.mxu0
        %v762 = vadd.f32 %v641, %v761
        %v763 = vpop.f32.mrf.mxu0
        %764 = vmatprep.mubr.bf16.mxu0 0
        %765 = vmatmul.mubr.bf16.gmra.mxu0 %v679
        %v766 = vpop.f32.mrf.mxu0
        %v767 = vadd.f32 %v646, %v766
        %v768 = vpop.f32.mrf.mxu0
        %v769 = vpop.f32.mrf.mxu0
        %v770 = vadd.f32 %v649, %v769
        %v771 = vpop.f32.mrf.mxu0
        %772 = vmatprep.mubr.bf16.mxu0 0
        %773 = vmatmul.mubr.bf16.gmra.mxu0 %v682
        %v774 = vpop.f32.mrf.mxu0
        %v775 = vadd.f32 %v654, %v774
        %v776 = vpop.f32.mrf.mxu0
        %v777 = vpop.f32.mrf.mxu0
        %v778 = vadd.f32 %v657, %v777
        %v779 = vpop.f32.mrf.mxu0
        %780 = vdwg.mxu0
        %v782 = vsel %vm538, %v436, 0
        %v785 = vsel %vm538, %v437, 0
        %v788 = vsel %vm538, %v438, 0
        %v791 = vsel %vm538, %v439, 0
        %v794 = vsel %vm538, %v440, 0
        %v797 = vsel %vm538, %v441, 0
        %v800 = vsel %vm538, %v442, 0
        %v803 = vsel %vm538, %v443, 0
        %805 = vmatprep.subr.bf16.mxu0 0
        %806 = vmatpush1.bf16.msra.mxu0 0
        %807 = vmatprep.subr.bf16.mxu0 0
        %808 = vmatpush1.bf16.msra.mxu0 0
        %809 = vmatprep.subr.bf16.mxu0 0
        %810 = vmatpush1.bf16.msra.mxu0 0
        %811 = vmatprep.subr.bf16.mxu0 0
        %812 = vmatpush1.bf16.msra.mxu0 0
        %813 = vmatprep.subr.bf16.mxu0 0
        %814 = vmatpush1.bf16.msra.mxu0 0
        %815 = vmatprep.subr.bf16.mxu0 0
        %816 = vmatpush1.bf16.msra.mxu0 0
        %817 = vmatprep.subr.bf16.mxu0 0
        %818 = vmatpush1.bf16.msra.mxu0 0
        %819 = vmatprep.subr.bf16.mxu0 0
        %820 = vmatpush1.bf16.msra.mxu0 %v536
        %821 = vmatprep.subr.bf16.mxu0 0
        %822 = vmatpush2.bf16.msra.mxu0 0
        %823 = vmatprep.subr.bf16.mxu0 0
        %824 = vmatpush2.bf16.msra.mxu0 0
        %825 = vmatprep.subr.bf16.mxu0 0
        %826 = vmatpush2.bf16.msra.mxu0 0
        %827 = vmatprep.subr.bf16.mxu0 0
        %828 = vmatpush2.bf16.msra.mxu0 0
        %829 = vmatprep.subr.bf16.mxu0 0
        %830 = vmatpush2.bf16.msra.mxu0 0
        %831 = vmatprep.subr.bf16.mxu0 0
        %832 = vmatpush2.bf16.msra.mxu0 0
        %833 = vmatprep.subr.bf16.mxu0 0
        %834 = vmatpush2.bf16.msra.mxu0 0
        %835 = vmatprep.subr.bf16.mxu0 0
        %836 = vmatpush2.bf16.msra.mxu0 0
        %837 = vmatprep.mubr.bf16.mxu0 0
        %838 = vmatmul.mubr.bf16.gmra.mxu0 %v782
        %v839 = vpop.f32.mrf.mxu0
        %v840 = vadd.f32 0.0, %v839
        %v841 = vpop.f32.mrf.mxu0
        %v842 = vpop.f32.mrf.mxu0
        %v843 = vadd.f32 0.0, %v842
        %v844 = vpop.f32.mrf.mxu0
        %845 = vmatprep.mubr.bf16.mxu0 0
        %846 = vmatmul.mubr.bf16.gmra.mxu0 %v785
        %v847 = vpop.f32.mrf.mxu0
        %v848 = vadd.f32 0.0, %v847
        %v849 = vpop.f32.mrf.mxu0
        %v850 = vpop.f32.mrf.mxu0
        %v851 = vadd.f32 0.0, %v850
        %v852 = vpop.f32.mrf.mxu0
        %853 = vmatprep.mubr.bf16.mxu0 0
        %854 = vmatmul.mubr.bf16.gmra.mxu0 %v788
        %v855 = vpop.f32.mrf.mxu0
        %v856 = vadd.f32 0.0, %v855
        %v857 = vpop.f32.mrf.mxu0
        %v858 = vpop.f32.mrf.mxu0
        %v859 = vadd.f32 0.0, %v858
        %v860 = vpop.f32.mrf.mxu0
        %861 = vmatprep.mubr.bf16.mxu0 0
        %862 = vmatmul.mubr.bf16.gmra.mxu0 %v791
        %v863 = vpop.f32.mrf.mxu0
        %v864 = vadd.f32 0.0, %v863
        %v865 = vpop.f32.mrf.mxu0
        %v866 = vpop.f32.mrf.mxu0
        %v867 = vadd.f32 0.0, %v866
        %v868 = vpop.f32.mrf.mxu0
        %869 = vmatprep.mubr.bf16.mxu0 0
        %870 = vmatmul.mubr.bf16.gmra.mxu0 %v794
        %v871 = vpop.f32.mrf.mxu0
        %v872 = vadd.f32 0.0, %v871
        %v873 = vpop.f32.mrf.mxu0
        %v874 = vpop.f32.mrf.mxu0
        %v875 = vadd.f32 0.0, %v874
        %v876 = vpop.f32.mrf.mxu0
        %877 = vmatprep.mubr.bf16.mxu0 0
        %878 = vmatmul.mubr.bf16.gmra.mxu0 %v797
        %v879 = vpop.f32.mrf.mxu0
        %v880 = vadd.f32 0.0, %v879
        %v881 = vpop.f32.mrf.mxu0
        %v882 = vpop.f32.mrf.mxu0
        %v883 = vadd.f32 0.0, %v882
        %v884 = vpop.f32.mrf.mxu0
        %885 = vmatprep.mubr.bf16.mxu0 0
        %886 = vmatmul.mubr.bf16.gmra.mxu0 %v800
        %v887 = vpop.f32.mrf.mxu0
        %v888 = vadd.f32 0.0, %v887
        %v889 = vpop.f32.mrf.mxu0
        %v890 = vpop.f32.mrf.mxu0
        %v891 = vadd.f32 0.0, %v890
        %v892 = vpop.f32.mrf.mxu0
        %893 = vmatprep.mubr.bf16.mxu0 0
        %894 = vmatmul.mubr.bf16.gmra.mxu0 %v803
        %v895 = vpop.f32.mrf.mxu0
        %v896 = vadd.f32 0.0, %v895
        %v897 = vpop.f32.mrf.mxu0
        %v898 = vpop.f32.mrf.mxu0
        %v899 = vadd.f32 0.0, %v898
        %v900 = vpop.f32.mrf.mxu0
        %901 = vdwg.mxu0
        %v902 = vadd.f32 %v719, %v840
        %v903 = vadd.f32 %v722, %v843
        %v904 = vadd.f32 %v727, %v848
        %v905 = vadd.f32 %v730, %v851
        %v906 = vadd.f32 %v735, %v856
        %v907 = vadd.f32 %v738, %v859
        %v908 = vadd.f32 %v743, %v864
        %v909 = vadd.f32 %v746, %v867
        %v910 = vadd.f32 %v751, %v872
        %v911 = vadd.f32 %v754, %v875
        %v912 = vadd.f32 %v759, %v880
        %v913 = vadd.f32 %v762, %v883
        %v914 = vadd.f32 %v767, %v888
        %v915 = vadd.f32 %v770, %v891
        %v916 = vadd.f32 %v775, %v896
        %v917 = vadd.f32 %v778, %v899
        %v920 = vunpack.c.l.b16 %v354
        %v921 = vunpack.c.l.b16 %v355
        %v922 = vpack.c.b16 %v921, %v920
        %924 = vmatprep.subr.bf16.mxu0 0
        %925 = vmatpush1.bf16.msra.mxu0 0
        %926 = vmatprep.subr.bf16.mxu0 0
        %927 = vmatpush1.bf16.msra.mxu0 0
        %928 = vmatprep.subr.bf16.mxu0 0
        %929 = vmatpush1.bf16.msra.mxu0 0
        %930 = vmatprep.subr.bf16.mxu0 0
        %931 = vmatpush1.bf16.msra.mxu0 0
        %932 = vmatprep.subr.bf16.mxu0 0
        %933 = vmatpush1.bf16.msra.mxu0 0
        %934 = vmatprep.subr.bf16.mxu0 0
        %935 = vmatpush1.bf16.msra.mxu0 0
        %936 = vmatprep.subr.bf16.mxu0 0
        %937 = vmatpush1.bf16.msra.mxu0 0
        %938 = vmatprep.subr.bf16.mxu0 0
        %939 = vmatpush1.bf16.msra.mxu0 %v922
        %940 = vmatprep.subr.bf16.mxu0 0
        %941 = vmatpush2.bf16.msra.mxu0 0
        %942 = vmatprep.subr.bf16.mxu0 0
        %943 = vmatpush2.bf16.msra.mxu0 0
        %944 = vmatprep.subr.bf16.mxu0 0
        %945 = vmatpush2.bf16.msra.mxu0 0
        %946 = vmatprep.subr.bf16.mxu0 0
        %947 = vmatpush2.bf16.msra.mxu0 0
        %948 = vmatprep.subr.bf16.mxu0 0
        %949 = vmatpush2.bf16.msra.mxu0 0
        %950 = vmatprep.subr.bf16.mxu0 0
        %951 = vmatpush2.bf16.msra.mxu0 0
        %952 = vmatprep.subr.bf16.mxu0 0
        %953 = vmatpush2.bf16.msra.mxu0 0
        %954 = vmatprep.subr.bf16.mxu0 0
        %955 = vmatpush2.bf16.msra.mxu0 0
        %956 = vmatprep.mubr.bf16.mxu0 0
        %957 = vmatmul.mubr.bf16.gmra.mxu0 %v540
        %v958 = vpop.f32.mrf.mxu0
        %v959 = vadd.f32 0.0, %v958
        %v960 = vpop.f32.mrf.mxu0
        %v961 = vpop.f32.mrf.mxu0
        %v962 = vadd.f32 0.0, %v961
        %v963 = vpop.f32.mrf.mxu0
        %964 = vmatprep.mubr.bf16.mxu0 0
        %965 = vmatmul.mubr.bf16.gmra.mxu0 %v543
        %v966 = vpop.f32.mrf.mxu0
        %v967 = vadd.f32 0.0, %v966
        %v968 = vpop.f32.mrf.mxu0
        %v969 = vpop.f32.mrf.mxu0
        %v970 = vadd.f32 0.0, %v969
        %v971 = vpop.f32.mrf.mxu0
        %972 = vmatprep.mubr.bf16.mxu0 0
        %973 = vmatmul.mubr.bf16.gmra.mxu0 %v546
        %v974 = vpop.f32.mrf.mxu0
        %v975 = vadd.f32 0.0, %v974
        %v976 = vpop.f32.mrf.mxu0
        %v977 = vpop.f32.mrf.mxu0
        %v978 = vadd.f32 0.0, %v977
        %v979 = vpop.f32.mrf.mxu0
        %980 = vmatprep.mubr.bf16.mxu0 0
        %981 = vmatmul.mubr.bf16.gmra.mxu0 %v549
        %v982 = vpop.f32.mrf.mxu0
        %v983 = vadd.f32 0.0, %v982
        %v984 = vpop.f32.mrf.mxu0
        %v985 = vpop.f32.mrf.mxu0
        %v986 = vadd.f32 0.0, %v985
        %v987 = vpop.f32.mrf.mxu0
        %988 = vmatprep.mubr.bf16.mxu0 0
        %989 = vmatmul.mubr.bf16.gmra.mxu0 %v552
        %v990 = vpop.f32.mrf.mxu0
        %v991 = vadd.f32 0.0, %v990
        %v992 = vpop.f32.mrf.mxu0
        %v993 = vpop.f32.mrf.mxu0
        %v994 = vadd.f32 0.0, %v993
        %v995 = vpop.f32.mrf.mxu0
        %996 = vmatprep.mubr.bf16.mxu0 0
        %997 = vmatmul.mubr.bf16.gmra.mxu0 %v555
        %v998 = vpop.f32.mrf.mxu0
        %v999 = vadd.f32 0.0, %v998
        %v1000 = vpop.f32.mrf.mxu0
        %v1001 = vpop.f32.mrf.mxu0
        %v1002 = vadd.f32 0.0, %v1001
        %v1003 = vpop.f32.mrf.mxu0
        %1004 = vmatprep.mubr.bf16.mxu0 0
        %1005 = vmatmul.mubr.bf16.gmra.mxu0 %v558
        %v1006 = vpop.f32.mrf.mxu0
        %v1007 = vadd.f32 0.0, %v1006
        %v1008 = vpop.f32.mrf.mxu0
        %v1009 = vpop.f32.mrf.mxu0
        %v1010 = vadd.f32 0.0, %v1009
        %v1011 = vpop.f32.mrf.mxu0
        %1012 = vmatprep.mubr.bf16.mxu0 0
        %1013 = vmatmul.mubr.bf16.gmra.mxu0 %v561
        %v1014 = vpop.f32.mrf.mxu0
        %v1015 = vadd.f32 0.0, %v1014
        %v1016 = vpop.f32.mrf.mxu0
        %v1017 = vpop.f32.mrf.mxu0
        %v1018 = vadd.f32 0.0, %v1017
        %v1019 = vpop.f32.mrf.mxu0
        %1020 = vdwg.mxu0
        %1021 = vmatprep.subr.bf16.mxu0 0
        %1022 = vmatpush1.bf16.msra.mxu0 0
        %1023 = vmatprep.subr.bf16.mxu0 0
        %1024 = vmatpush1.bf16.msra.mxu0 0
        %1025 = vmatprep.subr.bf16.mxu0 0
        %1026 = vmatpush1.bf16.msra.mxu0 0
        %1027 = vmatprep.subr.bf16.mxu0 0
        %1028 = vmatpush1.bf16.msra.mxu0 0
        %1029 = vmatprep.subr.bf16.mxu0 0
        %1030 = vmatpush1.bf16.msra.mxu0 0
        %1031 = vmatprep.subr.bf16.mxu0 0
        %1032 = vmatpush1.bf16.msra.mxu0 0
        %1033 = vmatprep.subr.bf16.mxu0 0
        %1034 = vmatpush1.bf16.msra.mxu0 0
        %1035 = vmatprep.subr.bf16.mxu0 0
        %1036 = vmatpush1.bf16.msra.mxu0 %v922
        %1037 = vmatprep.subr.bf16.mxu0 0
        %1038 = vmatpush2.bf16.msra.mxu0 0
        %1039 = vmatprep.subr.bf16.mxu0 0
        %1040 = vmatpush2.bf16.msra.mxu0 0
        %1041 = vmatprep.subr.bf16.mxu0 0
        %1042 = vmatpush2.bf16.msra.mxu0 0
        %1043 = vmatprep.subr.bf16.mxu0 0
        %1044 = vmatpush2.bf16.msra.mxu0 0
        %1045 = vmatprep.subr.bf16.mxu0 0
        %1046 = vmatpush2.bf16.msra.mxu0 0
        %1047 = vmatprep.subr.bf16.mxu0 0
        %1048 = vmatpush2.bf16.msra.mxu0 0
        %1049 = vmatprep.subr.bf16.mxu0 0
        %1050 = vmatpush2.bf16.msra.mxu0 0
        %1051 = vmatprep.subr.bf16.mxu0 0
        %1052 = vmatpush2.bf16.msra.mxu0 0
        %1053 = vmatprep.mubr.bf16.mxu0 0
        %1054 = vmatmul.mubr.bf16.gmra.mxu0 %v661
        %v1055 = vpop.f32.mrf.mxu0
        %v1056 = vadd.f32 %v959, %v1055
        %v1057 = vpop.f32.mrf.mxu0
        %v1058 = vpop.f32.mrf.mxu0
        %v1059 = vadd.f32 %v962, %v1058
        %v1060 = vpop.f32.mrf.mxu0
        %1061 = vmatprep.mubr.bf16.mxu0 0
        %1062 = vmatmul.mubr.bf16.gmra.mxu0 %v664
        %v1063 = vpop.f32.mrf.mxu0
        %v1064 = vadd.f32 %v967, %v1063
        %v1065 = vpop.f32.mrf.mxu0
        %v1066 = vpop.f32.mrf.mxu0
        %v1067 = vadd.f32 %v970, %v1066
        %v1068 = vpop.f32.mrf.mxu0
        %1069 = vmatprep.mubr.bf16.mxu0 0
        %1070 = vmatmul.mubr.bf16.gmra.mxu0 %v667
        %v1071 = vpop.f32.mrf.mxu0
        %v1072 = vadd.f32 %v975, %v1071
        %v1073 = vpop.f32.mrf.mxu0
        %v1074 = vpop.f32.mrf.mxu0
        %v1075 = vadd.f32 %v978, %v1074
        %v1076 = vpop.f32.mrf.mxu0
        %1077 = vmatprep.mubr.bf16.mxu0 0
        %1078 = vmatmul.mubr.bf16.gmra.mxu0 %v670
        %v1079 = vpop.f32.mrf.mxu0
        %v1080 = vadd.f32 %v983, %v1079
        %v1081 = vpop.f32.mrf.mxu0
        %v1082 = vpop.f32.mrf.mxu0
        %v1083 = vadd.f32 %v986, %v1082
        %v1084 = vpop.f32.mrf.mxu0
        %1085 = vmatprep.mubr.bf16.mxu0 0
        %1086 = vmatmul.mubr.bf16.gmra.mxu0 %v673
        %v1087 = vpop.f32.mrf.mxu0
        %v1088 = vadd.f32 %v991, %v1087
        %v1089 = vpop.f32.mrf.mxu0
        %v1090 = vpop.f32.mrf.mxu0
        %v1091 = vadd.f32 %v994, %v1090
        %v1092 = vpop.f32.mrf.mxu0
        %1093 = vmatprep.mubr.bf16.mxu0 0
        %1094 = vmatmul.mubr.bf16.gmra.mxu0 %v676
        %v1095 = vpop.f32.mrf.mxu0
        %v1096 = vadd.f32 %v999, %v1095
        %v1097 = vpop.f32.mrf.mxu0
        %v1098 = vpop.f32.mrf.mxu0
        %v1099 = vadd.f32 %v1002, %v1098
        %v1100 = vpop.f32.mrf.mxu0
        %1101 = vmatprep.mubr.bf16.mxu0 0
        %1102 = vmatmul.mubr.bf16.gmra.mxu0 %v679
        %v1103 = vpop.f32.mrf.mxu0
        %v1104 = vadd.f32 %v1007, %v1103
        %v1105 = vpop.f32.mrf.mxu0
        %v1106 = vpop.f32.mrf.mxu0
        %v1107 = vadd.f32 %v1010, %v1106
        %v1108 = vpop.f32.mrf.mxu0
        %1109 = vmatprep.mubr.bf16.mxu0 0
        %1110 = vmatmul.mubr.bf16.gmra.mxu0 %v682
        %v1111 = vpop.f32.mrf.mxu0
        %v1112 = vadd.f32 %v1015, %v1111
        %v1113 = vpop.f32.mrf.mxu0
        %v1114 = vpop.f32.mrf.mxu0
        %v1115 = vadd.f32 %v1018, %v1114
        %v1116 = vpop.f32.mrf.mxu0
        %1117 = vdwg.mxu0
        %1118 = vmatprep.subr.bf16.mxu0 0
        %1119 = vmatpush1.bf16.msra.mxu0 0
        %1120 = vmatprep.subr.bf16.mxu0 0
        %1121 = vmatpush1.bf16.msra.mxu0 0
        %1122 = vmatprep.subr.bf16.mxu0 0
        %1123 = vmatpush1.bf16.msra.mxu0 0
        %1124 = vmatprep.subr.bf16.mxu0 0
        %1125 = vmatpush1.bf16.msra.mxu0 0
        %1126 = vmatprep.subr.bf16.mxu0 0
        %1127 = vmatpush1.bf16.msra.mxu0 0
        %1128 = vmatprep.subr.bf16.mxu0 0
        %1129 = vmatpush1.bf16.msra.mxu0 0
        %1130 = vmatprep.subr.bf16.mxu0 0
        %1131 = vmatpush1.bf16.msra.mxu0 0
        %1132 = vmatprep.subr.bf16.mxu0 0
        %1133 = vmatpush1.bf16.msra.mxu0 %v922
        %1134 = vmatprep.subr.bf16.mxu0 0
        %1135 = vmatpush2.bf16.msra.mxu0 0
        %1136 = vmatprep.subr.bf16.mxu0 0
        %1137 = vmatpush2.bf16.msra.mxu0 0
        %1138 = vmatprep.subr.bf16.mxu0 0
        %1139 = vmatpush2.bf16.msra.mxu0 0
        %1140 = vmatprep.subr.bf16.mxu0 0
        %1141 = vmatpush2.bf16.msra.mxu0 0
        %1142 = vmatprep.subr.bf16.mxu0 0
        %1143 = vmatpush2.bf16.msra.mxu0 0
        %1144 = vmatprep.subr.bf16.mxu0 0
        %1145 = vmatpush2.bf16.msra.mxu0 0
        %1146 = vmatprep.subr.bf16.mxu0 0
        %1147 = vmatpush2.bf16.msra.mxu0 0
        %1148 = vmatprep.subr.bf16.mxu0 0
        %1149 = vmatpush2.bf16.msra.mxu0 0
        %1150 = vmatprep.mubr.bf16.mxu0 0
        %1151 = vmatmul.mubr.bf16.gmra.mxu0 %v782
        %v1152 = vpop.f32.mrf.mxu0
        %v1153 = vadd.f32 0.0, %v1152
        %v1154 = vpop.f32.mrf.mxu0
        %v1155 = vpop.f32.mrf.mxu0
        %v1156 = vadd.f32 0.0, %v1155
        %v1157 = vpop.f32.mrf.mxu0
        %1158 = vmatprep.mubr.bf16.mxu0 0
        %1159 = vmatmul.mubr.bf16.gmra.mxu0 %v785
        %v1160 = vpop.f32.mrf.mxu0
        %v1161 = vadd.f32 0.0, %v1160
        %v1162 = vpop.f32.mrf.mxu0
        %v1163 = vpop.f32.mrf.mxu0
        %v1164 = vadd.f32 0.0, %v1163
        %v1165 = vpop.f32.mrf.mxu0
        %1166 = vmatprep.mubr.bf16.mxu0 0
        %1167 = vmatmul.mubr.bf16.gmra.mxu0 %v788
        %v1168 = vpop.f32.mrf.mxu0
        %v1169 = vadd.f32 0.0, %v1168
        %v1170 = vpop.f32.mrf.mxu0
        %v1171 = vpop.f32.mrf.mxu0
        %v1172 = vadd.f32 0.0, %v1171
        %v1173 = vpop.f32.mrf.mxu0
        %1174 = vmatprep.mubr.bf16.mxu0 0
        %1175 = vmatmul.mubr.bf16.gmra.mxu0 %v791
        %v1176 = vpop.f32.mrf.mxu0
        %v1177 = vadd.f32 0.0, %v1176
        %v1178 = vpop.f32.mrf.mxu0
        %v1179 = vpop.f32.mrf.mxu0
        %v1180 = vadd.f32 0.0, %v1179
        %v1181 = vpop.f32.mrf.mxu0
        %1182 = vmatprep.mubr.bf16.mxu0 0
        %1183 = vmatmul.mubr.bf16.gmra.mxu0 %v794
        %v1184 = vpop.f32.mrf.mxu0
        %v1185 = vadd.f32 0.0, %v1184
        %v1186 = vpop.f32.mrf.mxu0
        %v1187 = vpop.f32.mrf.mxu0
        %v1188 = vadd.f32 0.0, %v1187
        %v1189 = vpop.f32.mrf.mxu0
        %1190 = vmatprep.mubr.bf16.mxu0 0
        %1191 = vmatmul.mubr.bf16.gmra.mxu0 %v797
        %v1192 = vpop.f32.mrf.mxu0
        %v1193 = vadd.f32 0.0, %v1192
        %v1194 = vpop.f32.mrf.mxu0
        %v1195 = vpop.f32.mrf.mxu0
        %v1196 = vadd.f32 0.0, %v1195
        %v1197 = vpop.f32.mrf.mxu0
        %1198 = vmatprep.mubr.bf16.mxu0 0
        %1199 = vmatmul.mubr.bf16.gmra.mxu0 %v800
        %v1200 = vpop.f32.mrf.mxu0
        %v1201 = vadd.f32 0.0, %v1200
        %v1202 = vpop.f32.mrf.mxu0
        %v1203 = vpop.f32.mrf.mxu0
        %v1204 = vadd.f32 0.0, %v1203
        %v1205 = vpop.f32.mrf.mxu0
        %1206 = vmatprep.mubr.bf16.mxu0 0
        %1207 = vmatmul.mubr.bf16.gmra.mxu0 %v803
        %v1208 = vpop.f32.mrf.mxu0
        %v1209 = vadd.f32 0.0, %v1208
        %v1210 = vpop.f32.mrf.mxu0
        %v1211 = vpop.f32.mrf.mxu0
        %v1212 = vadd.f32 0.0, %v1211
        %v1213 = vpop.f32.mrf.mxu0
        %1214 = vdwg.mxu0
        %v1215 = vadd.f32 %v1056, %v1153
        %v1216 = vadd.f32 %v1059, %v1156
        %v1217 = vadd.f32 %v1064, %v1161
        %v1218 = vadd.f32 %v1067, %v1164
        %v1219 = vadd.f32 %v1072, %v1169
        %v1220 = vadd.f32 %v1075, %v1172
        %v1221 = vadd.f32 %v1080, %v1177
        %v1222 = vadd.f32 %v1083, %v1180
        %v1223 = vadd.f32 %v1088, %v1185
        %v1224 = vadd.f32 %v1091, %v1188
        %v1225 = vadd.f32 %v1096, %v1193
        %v1226 = vadd.f32 %v1099, %v1196
        %v1227 = vadd.f32 %v1104, %v1201
        %v1228 = vadd.f32 %v1107, %v1204
        %v1229 = vadd.f32 %v1112, %v1209
        %v1230 = vadd.f32 %v1115, %v1212
        %1239 = vrot.lane.b32.xlu0 %v484, 112
        %v1240 = vpop.permute.xlu0 %1239
        %1241 = vrot.lane.b32.xlu0 %v485, 112
        %v1242 = vpop.permute.xlu0 %1241
        %1243 = vrot.lane.b32.xlu0 %v486, 112
        %v1244 = vpop.permute.xlu0 %1243
        %1245 = vrot.lane.b32.xlu0 %v487, 112
        %v1246 = vpop.permute.xlu0 %1245
        %1247 = vrot.lane.b32.xlu0 %v488, 112
        %v1248 = vpop.permute.xlu0 %1247
        %1249 = vrot.lane.b32.xlu0 %v489, 112
        %v1250 = vpop.permute.xlu0 %1249
        %1251 = vrot.lane.b32.xlu0 %v490, 112
        %v1252 = vpop.permute.xlu0 %1251
        %1253 = vrot.lane.b32.xlu0 %v491, 112
        %v1254 = vpop.permute.xlu0 %1253
        %v1256 = vsel %vm538, %v1240, 0
        %v1259 = vsel %vm538, %v1242, 0
        %v1262 = vsel %vm538, %v1244, 0
        %v1265 = vsel %vm538, %v1246, 0
        %v1268 = vsel %vm538, %v1248, 0
        %v1271 = vsel %vm538, %v1250, 0
        %v1274 = vsel %vm538, %v1252, 0
        %v1277 = vsel %vm538, %v1254, 0
        %1279 = vmatprep.subr.bf16.mxu0 0
        %1280 = vmatpush1.bf16.msra.mxu0 0
        %1281 = vmatprep.subr.bf16.mxu0 0
        %1282 = vmatpush1.bf16.msra.mxu0 0
        %1283 = vmatprep.subr.bf16.mxu0 0
        %1284 = vmatpush1.bf16.msra.mxu0 0
        %1285 = vmatprep.subr.bf16.mxu0 0
        %1286 = vmatpush1.bf16.msra.mxu0 0
        %1287 = vmatprep.subr.bf16.mxu0 0
        %1288 = vmatpush1.bf16.msra.mxu0 0
        %1289 = vmatprep.subr.bf16.mxu0 0
        %1290 = vmatpush1.bf16.msra.mxu0 0
        %1291 = vmatprep.subr.bf16.mxu0 0
        %1292 = vmatpush1.bf16.msra.mxu0 0
        %1293 = vmatprep.subr.bf16.mxu0 0
        %1294 = vmatpush1.bf16.msra.mxu0 %v536
        %1295 = vmatprep.subr.bf16.mxu0 0
        %1296 = vmatpush2.bf16.msra.mxu0 0
        %1297 = vmatprep.subr.bf16.mxu0 0
        %1298 = vmatpush2.bf16.msra.mxu0 0
        %1299 = vmatprep.subr.bf16.mxu0 0
        %1300 = vmatpush2.bf16.msra.mxu0 0
        %1301 = vmatprep.subr.bf16.mxu0 0
        %1302 = vmatpush2.bf16.msra.mxu0 0
        %1303 = vmatprep.subr.bf16.mxu0 0
        %1304 = vmatpush2.bf16.msra.mxu0 0
        %1305 = vmatprep.subr.bf16.mxu0 0
        %1306 = vmatpush2.bf16.msra.mxu0 0
        %1307 = vmatprep.subr.bf16.mxu0 0
        %1308 = vmatpush2.bf16.msra.mxu0 0
        %1309 = vmatprep.subr.bf16.mxu0 0
        %1310 = vmatpush2.bf16.msra.mxu0 0
        %1311 = vmatprep.mubr.bf16.mxu0 0
        %1312 = vmatmul.mubr.bf16.gmra.mxu0 %v1256
        %v1313 = vpop.f32.mrf.mxu0
        %v1314 = vadd.f32 0.0, %v1313
        %v1315 = vpop.f32.mrf.mxu0
        %v1316 = vpop.f32.mrf.mxu0
        %v1317 = vadd.f32 0.0, %v1316
        %v1318 = vpop.f32.mrf.mxu0
        %1319 = vmatprep.mubr.bf16.mxu0 0
        %1320 = vmatmul.mubr.bf16.gmra.mxu0 %v1259
        %v1321 = vpop.f32.mrf.mxu0
        %v1322 = vadd.f32 0.0, %v1321
        %v1323 = vpop.f32.mrf.mxu0
        %v1324 = vpop.f32.mrf.mxu0
        %v1325 = vadd.f32 0.0, %v1324
        %v1326 = vpop.f32.mrf.mxu0
        %1327 = vmatprep.mubr.bf16.mxu0 0
        %1328 = vmatmul.mubr.bf16.gmra.mxu0 %v1262
        %v1329 = vpop.f32.mrf.mxu0
        %v1330 = vadd.f32 0.0, %v1329
        %v1331 = vpop.f32.mrf.mxu0
        %v1332 = vpop.f32.mrf.mxu0
        %v1333 = vadd.f32 0.0, %v1332
        %v1334 = vpop.f32.mrf.mxu0
        %1335 = vmatprep.mubr.bf16.mxu0 0
        %1336 = vmatmul.mubr.bf16.gmra.mxu0 %v1265
        %v1337 = vpop.f32.mrf.mxu0
        %v1338 = vadd.f32 0.0, %v1337
        %v1339 = vpop.f32.mrf.mxu0
        %v1340 = vpop.f32.mrf.mxu0
        %v1341 = vadd.f32 0.0, %v1340
        %v1342 = vpop.f32.mrf.mxu0
        %1343 = vmatprep.mubr.bf16.mxu0 0
        %1344 = vmatmul.mubr.bf16.gmra.mxu0 %v1268
        %v1345 = vpop.f32.mrf.mxu0
        %v1346 = vadd.f32 0.0, %v1345
        %v1347 = vpop.f32.mrf.mxu0
        %v1348 = vpop.f32.mrf.mxu0
        %v1349 = vadd.f32 0.0, %v1348
        %v1350 = vpop.f32.mrf.mxu0
        %1351 = vmatprep.mubr.bf16.mxu0 0
        %1352 = vmatmul.mubr.bf16.gmra.mxu0 %v1271
        %v1353 = vpop.f32.mrf.mxu0
        %v1354 = vadd.f32 0.0, %v1353
        %v1355 = vpop.f32.mrf.mxu0
        %v1356 = vpop.f32.mrf.mxu0
        %v1357 = vadd.f32 0.0, %v1356
        %v1358 = vpop.f32.mrf.mxu0
        %1359 = vmatprep.mubr.bf16.mxu0 0
        %1360 = vmatmul.mubr.bf16.gmra.mxu0 %v1274
        %v1361 = vpop.f32.mrf.mxu0
        %v1362 = vadd.f32 0.0, %v1361
        %v1363 = vpop.f32.mrf.mxu0
        %v1364 = vpop.f32.mrf.mxu0
        %v1365 = vadd.f32 0.0, %v1364
        %v1366 = vpop.f32.mrf.mxu0
        %1367 = vmatprep.mubr.bf16.mxu0 0
        %1368 = vmatmul.mubr.bf16.gmra.mxu0 %v1277
        %v1369 = vpop.f32.mrf.mxu0
        %v1370 = vadd.f32 0.0, %v1369
        %v1371 = vpop.f32.mrf.mxu0
        %v1372 = vpop.f32.mrf.mxu0
        %v1373 = vadd.f32 0.0, %v1372
        %v1374 = vpop.f32.mrf.mxu0
        %1375 = vdwg.mxu0
        %1384 = vrot.lane.b32.xlu0 %v444, 112
        %v1385 = vpop.permute.xlu0 %1384
        %1386 = vrot.lane.b32.xlu0 %v445, 112
        %v1387 = vpop.permute.xlu0 %1386
        %1388 = vrot.lane.b32.xlu0 %v446, 112
        %v1389 = vpop.permute.xlu0 %1388
        %1390 = vrot.lane.b32.xlu0 %v447, 112
        %v1391 = vpop.permute.xlu0 %1390
        %1392 = vrot.lane.b32.xlu0 %v448, 112
        %v1393 = vpop.permute.xlu0 %1392
        %1394 = vrot.lane.b32.xlu0 %v449, 112
        %v1395 = vpop.permute.xlu0 %1394
        %1396 = vrot.lane.b32.xlu0 %v450, 112
        %v1397 = vpop.permute.xlu0 %1396
        %1398 = vrot.lane.b32.xlu0 %v451, 112
        %v1399 = vpop.permute.xlu0 %1398
        %v1401 = vsel %vm538, %v1385, 0
        %v1404 = vsel %vm538, %v1387, 0
        %v1407 = vsel %vm538, %v1389, 0
        %v1410 = vsel %vm538, %v1391, 0
        %v1413 = vsel %vm538, %v1393, 0
        %v1416 = vsel %vm538, %v1395, 0
        %v1419 = vsel %vm538, %v1397, 0
        %v1422 = vsel %vm538, %v1399, 0
        %1424 = vmatprep.subr.bf16.mxu0 0
        %1425 = vmatpush1.bf16.msra.mxu0 0
        %1426 = vmatprep.subr.bf16.mxu0 0
        %1427 = vmatpush1.bf16.msra.mxu0 0
        %1428 = vmatprep.subr.bf16.mxu0 0
        %1429 = vmatpush1.bf16.msra.mxu0 0
        %1430 = vmatprep.subr.bf16.mxu0 0
        %1431 = vmatpush1.bf16.msra.mxu0 0
        %1432 = vmatprep.subr.bf16.mxu0 0
        %1433 = vmatpush1.bf16.msra.mxu0 0
        %1434 = vmatprep.subr.bf16.mxu0 0
        %1435 = vmatpush1.bf16.msra.mxu0 0
        %1436 = vmatprep.subr.bf16.mxu0 0
        %1437 = vmatpush1.bf16.msra.mxu0 0
        %1438 = vmatprep.subr.bf16.mxu0 0
        %1439 = vmatpush1.bf16.msra.mxu0 %v536
        %1440 = vmatprep.subr.bf16.mxu0 0
        %1441 = vmatpush2.bf16.msra.mxu0 0
        %1442 = vmatprep.subr.bf16.mxu0 0
        %1443 = vmatpush2.bf16.msra.mxu0 0
        %1444 = vmatprep.subr.bf16.mxu0 0
        %1445 = vmatpush2.bf16.msra.mxu0 0
        %1446 = vmatprep.subr.bf16.mxu0 0
        %1447 = vmatpush2.bf16.msra.mxu0 0
        %1448 = vmatprep.subr.bf16.mxu0 0
        %1449 = vmatpush2.bf16.msra.mxu0 0
        %1450 = vmatprep.subr.bf16.mxu0 0
        %1451 = vmatpush2.bf16.msra.mxu0 0
        %1452 = vmatprep.subr.bf16.mxu0 0
        %1453 = vmatpush2.bf16.msra.mxu0 0
        %1454 = vmatprep.subr.bf16.mxu0 0
        %1455 = vmatpush2.bf16.msra.mxu0 0
        %1456 = vmatprep.mubr.bf16.mxu0 0
        %1457 = vmatmul.mubr.bf16.gmra.mxu0 %v1401
        %v1458 = vpop.f32.mrf.mxu0
        %v1459 = vadd.f32 %v1314, %v1458
        %v1460 = vpop.f32.mrf.mxu0
        %v1461 = vpop.f32.mrf.mxu0
        %v1462 = vadd.f32 %v1317, %v1461
        %v1463 = vpop.f32.mrf.mxu0
        %1464 = vmatprep.mubr.bf16.mxu0 0
        %1465 = vmatmul.mubr.bf16.gmra.mxu0 %v1404
        %v1466 = vpop.f32.mrf.mxu0
        %v1467 = vadd.f32 %v1322, %v1466
        %v1468 = vpop.f32.mrf.mxu0
        %v1469 = vpop.f32.mrf.mxu0
        %v1470 = vadd.f32 %v1325, %v1469
        %v1471 = vpop.f32.mrf.mxu0
        %1472 = vmatprep.mubr.bf16.mxu0 0
        %1473 = vmatmul.mubr.bf16.gmra.mxu0 %v1407
        %v1474 = vpop.f32.mrf.mxu0
        %v1475 = vadd.f32 %v1330, %v1474
        %v1476 = vpop.f32.mrf.mxu0
        %v1477 = vpop.f32.mrf.mxu0
        %v1478 = vadd.f32 %v1333, %v1477
        %v1479 = vpop.f32.mrf.mxu0
        %1480 = vmatprep.mubr.bf16.mxu0 0
        %1481 = vmatmul.mubr.bf16.gmra.mxu0 %v1410
        %v1482 = vpop.f32.mrf.mxu0
        %v1483 = vadd.f32 %v1338, %v1482
        %v1484 = vpop.f32.mrf.mxu0
        %v1485 = vpop.f32.mrf.mxu0
        %v1486 = vadd.f32 %v1341, %v1485
        %v1487 = vpop.f32.mrf.mxu0
        %1488 = vmatprep.mubr.bf16.mxu0 0
        %1489 = vmatmul.mubr.bf16.gmra.mxu0 %v1413
        %v1490 = vpop.f32.mrf.mxu0
        %v1491 = vadd.f32 %v1346, %v1490
        %v1492 = vpop.f32.mrf.mxu0
        %v1493 = vpop.f32.mrf.mxu0
        %v1494 = vadd.f32 %v1349, %v1493
        %v1495 = vpop.f32.mrf.mxu0
        %1496 = vmatprep.mubr.bf16.mxu0 0
        %1497 = vmatmul.mubr.bf16.gmra.mxu0 %v1416
        %v1498 = vpop.f32.mrf.mxu0
        %v1499 = vadd.f32 %v1354, %v1498
        %v1500 = vpop.f32.mrf.mxu0
        %v1501 = vpop.f32.mrf.mxu0
        %v1502 = vadd.f32 %v1357, %v1501
        %v1503 = vpop.f32.mrf.mxu0
        %1504 = vmatprep.mubr.bf16.mxu0 0
        %1505 = vmatmul.mubr.bf16.gmra.mxu0 %v1419
        %v1506 = vpop.f32.mrf.mxu0
        %v1507 = vadd.f32 %v1362, %v1506
        %v1508 = vpop.f32.mrf.mxu0
        %v1509 = vpop.f32.mrf.mxu0
        %v1510 = vadd.f32 %v1365, %v1509
        %v1511 = vpop.f32.mrf.mxu0
        %1512 = vmatprep.mubr.bf16.mxu0 0
        %1513 = vmatmul.mubr.bf16.gmra.mxu0 %v1422
        %v1514 = vpop.f32.mrf.mxu0
        %v1515 = vadd.f32 %v1370, %v1514
        %v1516 = vpop.f32.mrf.mxu0
        %v1517 = vpop.f32.mrf.mxu0
        %v1518 = vadd.f32 %v1373, %v1517
        %v1519 = vpop.f32.mrf.mxu0
        %1520 = vdwg.mxu0
        %1529 = vrot.lane.b32.xlu0 %v524, 112
        %v1530 = vpop.permute.xlu0 %1529
        %1531 = vrot.lane.b32.xlu0 %v525, 112
        %v1532 = vpop.permute.xlu0 %1531
        %1533 = vrot.lane.b32.xlu0 %v526, 112
        %v1534 = vpop.permute.xlu0 %1533
        %1535 = vrot.lane.b32.xlu0 %v527, 112
        %v1536 = vpop.permute.xlu0 %1535
        %1537 = vrot.lane.b32.xlu0 %v528, 112
        %v1538 = vpop.permute.xlu0 %1537
        %1539 = vrot.lane.b32.xlu0 %v529, 112
        %v1540 = vpop.permute.xlu0 %1539
        %1541 = vrot.lane.b32.xlu0 %v530, 112
        %v1542 = vpop.permute.xlu0 %1541
        %1543 = vrot.lane.b32.xlu0 %v531, 112
        %v1544 = vpop.permute.xlu0 %1543
        %v1546 = vsel %vm538, %v1530, 0
        %v1549 = vsel %vm538, %v1532, 0
        %v1552 = vsel %vm538, %v1534, 0
        %v1555 = vsel %vm538, %v1536, 0
        %v1558 = vsel %vm538, %v1538, 0
        %v1561 = vsel %vm538, %v1540, 0
        %v1564 = vsel %vm538, %v1542, 0
        %v1567 = vsel %vm538, %v1544, 0
        %1569 = vmatprep.subr.bf16.mxu0 0
        %1570 = vmatpush1.bf16.msra.mxu0 0
        %1571 = vmatprep.subr.bf16.mxu0 0
        %1572 = vmatpush1.bf16.msra.mxu0 0
        %1573 = vmatprep.subr.bf16.mxu0 0
        %1574 = vmatpush1.bf16.msra.mxu0 0
        %1575 = vmatprep.subr.bf16.mxu0 0
        %1576 = vmatpush1.bf16.msra.mxu0 0
        %1577 = vmatprep.subr.bf16.mxu0 0
        %1578 = vmatpush1.bf16.msra.mxu0 0
        %1579 = vmatprep.subr.bf16.mxu0 0
        %1580 = vmatpush1.bf16.msra.mxu0 0
        %1581 = vmatprep.subr.bf16.mxu0 0
        %1582 = vmatpush1.bf16.msra.mxu0 0
        %1583 = vmatprep.subr.bf16.mxu0 0
        %1584 = vmatpush1.bf16.msra.mxu0 %v536
        %1585 = vmatprep.subr.bf16.mxu0 0
        %1586 = vmatpush2.bf16.msra.mxu0 0
        %1587 = vmatprep.subr.bf16.mxu0 0
        %1588 = vmatpush2.bf16.msra.mxu0 0
        %1589 = vmatprep.subr.bf16.mxu0 0
        %1590 = vmatpush2.bf16.msra.mxu0 0
        %1591 = vmatprep.subr.bf16.mxu0 0
        %1592 = vmatpush2.bf16.msra.mxu0 0
        %1593 = vmatprep.subr.bf16.mxu0 0
        %1594 = vmatpush2.bf16.msra.mxu0 0
        %1595 = vmatprep.subr.bf16.mxu0 0
        %1596 = vmatpush2.bf16.msra.mxu0 0
        %1597 = vmatprep.subr.bf16.mxu0 0
        %1598 = vmatpush2.bf16.msra.mxu0 0
        %1599 = vmatprep.subr.bf16.mxu0 0
        %1600 = vmatpush2.bf16.msra.mxu0 0
        %1601 = vmatprep.mubr.bf16.mxu0 0
        %1602 = vmatmul.mubr.bf16.gmra.mxu0 %v1546
        %v1603 = vpop.f32.mrf.mxu0
        %v1604 = vadd.f32 0.0, %v1603
        %v1605 = vpop.f32.mrf.mxu0
        %v1606 = vpop.f32.mrf.mxu0
        %v1607 = vadd.f32 0.0, %v1606
        %v1608 = vpop.f32.mrf.mxu0
        %1609 = vmatprep.mubr.bf16.mxu0 0
        %1610 = vmatmul.mubr.bf16.gmra.mxu0 %v1549
        %v1611 = vpop.f32.mrf.mxu0
        %v1612 = vadd.f32 0.0, %v1611
        %v1613 = vpop.f32.mrf.mxu0
        %v1614 = vpop.f32.mrf.mxu0
        %v1615 = vadd.f32 0.0, %v1614
        %v1616 = vpop.f32.mrf.mxu0
        %1617 = vmatprep.mubr.bf16.mxu0 0
        %1618 = vmatmul.mubr.bf16.gmra.mxu0 %v1552
        %v1619 = vpop.f32.mrf.mxu0
        %v1620 = vadd.f32 0.0, %v1619
        %v1621 = vpop.f32.mrf.mxu0
        %v1622 = vpop.f32.mrf.mxu0
        %v1623 = vadd.f32 0.0, %v1622
        %v1624 = vpop.f32.mrf.mxu0
        %1625 = vmatprep.mubr.bf16.mxu0 0
        %1626 = vmatmul.mubr.bf16.gmra.mxu0 %v1555
        %v1627 = vpop.f32.mrf.mxu0
        %v1628 = vadd.f32 0.0, %v1627
        %v1629 = vpop.f32.mrf.mxu0
        %v1630 = vpop.f32.mrf.mxu0
        %v1631 = vadd.f32 0.0, %v1630
        %v1632 = vpop.f32.mrf.mxu0
        %1633 = vmatprep.mubr.bf16.mxu0 0
        %1634 = vmatmul.mubr.bf16.gmra.mxu0 %v1558
        %v1635 = vpop.f32.mrf.mxu0
        %v1636 = vadd.f32 0.0, %v1635
        %v1637 = vpop.f32.mrf.mxu0
        %v1638 = vpop.f32.mrf.mxu0
        %v1639 = vadd.f32 0.0, %v1638
        %v1640 = vpop.f32.mrf.mxu0
        %1641 = vmatprep.mubr.bf16.mxu0 0
        %1642 = vmatmul.mubr.bf16.gmra.mxu0 %v1561
        %v1643 = vpop.f32.mrf.mxu0
        %v1644 = vadd.f32 0.0, %v1643
        %v1645 = vpop.f32.mrf.mxu0
        %v1646 = vpop.f32.mrf.mxu0
        %v1647 = vadd.f32 0.0, %v1646
        %v1648 = vpop.f32.mrf.mxu0
        %1649 = vmatprep.mubr.bf16.mxu0 0
        %1650 = vmatmul.mubr.bf16.gmra.mxu0 %v1564
        %v1651 = vpop.f32.mrf.mxu0
        %v1652 = vadd.f32 0.0, %v1651
        %v1653 = vpop.f32.mrf.mxu0
        %v1654 = vpop.f32.mrf.mxu0
        %v1655 = vadd.f32 0.0, %v1654
        %v1656 = vpop.f32.mrf.mxu0
        %1657 = vmatprep.mubr.bf16.mxu0 0
        %1658 = vmatmul.mubr.bf16.gmra.mxu0 %v1567
        %v1659 = vpop.f32.mrf.mxu0
        %v1660 = vadd.f32 0.0, %v1659
        %v1661 = vpop.f32.mrf.mxu0
        %v1662 = vpop.f32.mrf.mxu0
        %v1663 = vadd.f32 0.0, %v1662
        %v1664 = vpop.f32.mrf.mxu0
        %1665 = vdwg.mxu0
        %v1666 = vadd.f32 %v1459, %v1604
        %v1667 = vadd.f32 %v1462, %v1607
        %v1668 = vadd.f32 %v1467, %v1612
        %v1669 = vadd.f32 %v1470, %v1615
        %v1670 = vadd.f32 %v1475, %v1620
        %v1671 = vadd.f32 %v1478, %v1623
        %v1672 = vadd.f32 %v1483, %v1628
        %v1673 = vadd.f32 %v1486, %v1631
        %v1674 = vadd.f32 %v1491, %v1636
        %v1675 = vadd.f32 %v1494, %v1639
        %v1676 = vadd.f32 %v1499, %v1644
        %v1677 = vadd.f32 %v1502, %v1647
        %v1678 = vadd.f32 %v1507, %v1652
        %v1679 = vadd.f32 %v1510, %v1655
        %v1680 = vadd.f32 %v1515, %v1660
        %v1681 = vadd.f32 %v1518, %v1663
        %1682 = vmatprep.subr.bf16.mxu0 0
        %1683 = vmatpush1.bf16.msra.mxu0 0
        %1684 = vmatprep.subr.bf16.mxu0 0
        %1685 = vmatpush1.bf16.msra.mxu0 0
        %1686 = vmatprep.subr.bf16.mxu0 0
        %1687 = vmatpush1.bf16.msra.mxu0 0
        %1688 = vmatprep.subr.bf16.mxu0 0
        %1689 = vmatpush1.bf16.msra.mxu0 0
        %1690 = vmatprep.subr.bf16.mxu0 0
        %1691 = vmatpush1.bf16.msra.mxu0 0
        %1692 = vmatprep.subr.bf16.mxu0 0
        %1693 = vmatpush1.bf16.msra.mxu0 0
        %1694 = vmatprep.subr.bf16.mxu0 0
        %1695 = vmatpush1.bf16.msra.mxu0 0
        %1696 = vmatprep.subr.bf16.mxu0 0
        %1697 = vmatpush1.bf16.msra.mxu0 %v922
        %1698 = vmatprep.subr.bf16.mxu0 0
        %1699 = vmatpush2.bf16.msra.mxu0 0
        %1700 = vmatprep.subr.bf16.mxu0 0
        %1701 = vmatpush2.bf16.msra.mxu0 0
        %1702 = vmatprep.subr.bf16.mxu0 0
        %1703 = vmatpush2.bf16.msra.mxu0 0
        %1704 = vmatprep.subr.bf16.mxu0 0
        %1705 = vmatpush2.bf16.msra.mxu0 0
        %1706 = vmatprep.subr.bf16.mxu0 0
        %1707 = vmatpush2.bf16.msra.mxu0 0
        %1708 = vmatprep.subr.bf16.mxu0 0
        %1709 = vmatpush2.bf16.msra.mxu0 0
        %1710 = vmatprep.subr.bf16.mxu0 0
        %1711 = vmatpush2.bf16.msra.mxu0 0
        %1712 = vmatprep.subr.bf16.mxu0 0
        %1713 = vmatpush2.bf16.msra.mxu0 0
        %1714 = vmatprep.mubr.bf16.mxu0 0
        %1715 = vmatmul.mubr.bf16.gmra.mxu0 %v1256
        %v1716 = vpop.f32.mrf.mxu0
        %v1717 = vadd.f32 0.0, %v1716
        %v1718 = vpop.f32.mrf.mxu0
        %v1719 = vpop.f32.mrf.mxu0
        %v1720 = vadd.f32 0.0, %v1719
        %v1721 = vpop.f32.mrf.mxu0
        %1722 = vmatprep.mubr.bf16.mxu0 0
        %1723 = vmatmul.mubr.bf16.gmra.mxu0 %v1259
        %v1724 = vpop.f32.mrf.mxu0
        %v1725 = vadd.f32 0.0, %v1724
        %v1726 = vpop.f32.mrf.mxu0
        %v1727 = vpop.f32.mrf.mxu0
        %v1728 = vadd.f32 0.0, %v1727
        %v1729 = vpop.f32.mrf.mxu0
        %1730 = vmatprep.mubr.bf16.mxu0 0
        %1731 = vmatmul.mubr.bf16.gmra.mxu0 %v1262
        %v1732 = vpop.f32.mrf.mxu0
        %v1733 = vadd.f32 0.0, %v1732
        %v1734 = vpop.f32.mrf.mxu0
        %v1735 = vpop.f32.mrf.mxu0
        %v1736 = vadd.f32 0.0, %v1735
        %v1737 = vpop.f32.mrf.mxu0
        %1738 = vmatprep.mubr.bf16.mxu0 0
        %1739 = vmatmul.mubr.bf16.gmra.mxu0 %v1265
        %v1740 = vpop.f32.mrf.mxu0
        %v1741 = vadd.f32 0.0, %v1740
        %v1742 = vpop.f32.mrf.mxu0
        %v1743 = vpop.f32.mrf.mxu0
        %v1744 = vadd.f32 0.0, %v1743
        %v1745 = vpop.f32.mrf.mxu0
        %1746 = vmatprep.mubr.bf16.mxu0 0
        %1747 = vmatmul.mubr.bf16.gmra.mxu0 %v1268
        %v1748 = vpop.f32.mrf.mxu0
        %v1749 = vadd.f32 0.0, %v1748
        %v1750 = vpop.f32.mrf.mxu0
        %v1751 = vpop.f32.mrf.mxu0
        %v1752 = vadd.f32 0.0, %v1751
        %v1753 = vpop.f32.mrf.mxu0
        %1754 = vmatprep.mubr.bf16.mxu0 0
        %1755 = vmatmul.mubr.bf16.gmra.mxu0 %v1271
        %v1756 = vpop.f32.mrf.mxu0
        %v1757 = vadd.f32 0.0, %v1756
        %v1758 = vpop.f32.mrf.mxu0
        %v1759 = vpop.f32.mrf.mxu0
        %v1760 = vadd.f32 0.0, %v1759
        %v1761 = vpop.f32.mrf.mxu0
        %1762 = vmatprep.mubr.bf16.mxu0 0
        %1763 = vmatmul.mubr.bf16.gmra.mxu0 %v1274
        %v1764 = vpop.f32.mrf.mxu0
        %v1765 = vadd.f32 0.0, %v1764
        %v1766 = vpop.f32.mrf.mxu0
        %v1767 = vpop.f32.mrf.mxu0
        %v1768 = vadd.f32 0.0, %v1767
        %v1769 = vpop.f32.mrf.mxu0
        %1770 = vmatprep.mubr.bf16.mxu0 0
        %1771 = vmatmul.mubr.bf16.gmra.mxu0 %v1277
        %v1772 = vpop.f32.mrf.mxu0
        %v1773 = vadd.f32 0.0, %v1772
        %v1774 = vpop.f32.mrf.mxu0
        %v1775 = vpop.f32.mrf.mxu0
        %v1776 = vadd.f32 0.0, %v1775
        %v1777 = vpop.f32.mrf.mxu0
        %1778 = vdwg.mxu0
        %1779 = vmatprep.subr.bf16.mxu0 0
        %1780 = vmatpush1.bf16.msra.mxu0 0
        %1781 = vmatprep.subr.bf16.mxu0 0
        %1782 = vmatpush1.bf16.msra.mxu0 0
        %1783 = vmatprep.subr.bf16.mxu0 0
        %1784 = vmatpush1.bf16.msra.mxu0 0
        %1785 = vmatprep.subr.bf16.mxu0 0
        %1786 = vmatpush1.bf16.msra.mxu0 0
        %1787 = vmatprep.subr.bf16.mxu0 0
        %1788 = vmatpush1.bf16.msra.mxu0 0
        %1789 = vmatprep.subr.bf16.mxu0 0
        %1790 = vmatpush1.bf16.msra.mxu0 0
        %1791 = vmatprep.subr.bf16.mxu0 0
        %1792 = vmatpush1.bf16.msra.mxu0 0
        %1793 = vmatprep.subr.bf16.mxu0 0
        %1794 = vmatpush1.bf16.msra.mxu0 %v922
        %1795 = vmatprep.subr.bf16.mxu0 0
        %1796 = vmatpush2.bf16.msra.mxu0 0
        %1797 = vmatprep.subr.bf16.mxu0 0
        %1798 = vmatpush2.bf16.msra.mxu0 0
        %1799 = vmatprep.subr.bf16.mxu0 0
        %1800 = vmatpush2.bf16.msra.mxu0 0
        %1801 = vmatprep.subr.bf16.mxu0 0
        %1802 = vmatpush2.bf16.msra.mxu0 0
        %1803 = vmatprep.subr.bf16.mxu0 0
        %1804 = vmatpush2.bf16.msra.mxu0 0
        %1805 = vmatprep.subr.bf16.mxu0 0
        %1806 = vmatpush2.bf16.msra.mxu0 0
        %1807 = vmatprep.subr.bf16.mxu0 0
        %1808 = vmatpush2.bf16.msra.mxu0 0
        %1809 = vmatprep.subr.bf16.mxu0 0
        %1810 = vmatpush2.bf16.msra.mxu0 0
        %1811 = vmatprep.mubr.bf16.mxu0 0
        %1812 = vmatmul.mubr.bf16.gmra.mxu0 %v1401
        %v1813 = vpop.f32.mrf.mxu0
        %v1814 = vadd.f32 %v1717, %v1813
        %v1815 = vpop.f32.mrf.mxu0
        %v1816 = vpop.f32.mrf.mxu0
        %v1817 = vadd.f32 %v1720, %v1816
        %v1818 = vpop.f32.mrf.mxu0
        %1819 = vmatprep.mubr.bf16.mxu0 0
        %1820 = vmatmul.mubr.bf16.gmra.mxu0 %v1404
        %v1821 = vpop.f32.mrf.mxu0
        %v1822 = vadd.f32 %v1725, %v1821
        %v1823 = vpop.f32.mrf.mxu0
        %v1824 = vpop.f32.mrf.mxu0
        %v1825 = vadd.f32 %v1728, %v1824
        %v1826 = vpop.f32.mrf.mxu0
        %1827 = vmatprep.mubr.bf16.mxu0 0
        %1828 = vmatmul.mubr.bf16.gmra.mxu0 %v1407
        %v1829 = vpop.f32.mrf.mxu0
        %v1830 = vadd.f32 %v1733, %v1829
        %v1831 = vpop.f32.mrf.mxu0
        %v1832 = vpop.f32.mrf.mxu0
        %v1833 = vadd.f32 %v1736, %v1832
        %v1834 = vpop.f32.mrf.mxu0
        %1835 = vmatprep.mubr.bf16.mxu0 0
        %1836 = vmatmul.mubr.bf16.gmra.mxu0 %v1410
        %v1837 = vpop.f32.mrf.mxu0
        %v1838 = vadd.f32 %v1741, %v1837
        %v1839 = vpop.f32.mrf.mxu0
        %v1840 = vpop.f32.mrf.mxu0
        %v1841 = vadd.f32 %v1744, %v1840
        %v1842 = vpop.f32.mrf.mxu0
        %1843 = vmatprep.mubr.bf16.mxu0 0
        %1844 = vmatmul.mubr.bf16.gmra.mxu0 %v1413
        %v1845 = vpop.f32.mrf.mxu0
        %v1846 = vadd.f32 %v1749, %v1845
        %v1847 = vpop.f32.mrf.mxu0
        %v1848 = vpop.f32.mrf.mxu0
        %v1849 = vadd.f32 %v1752, %v1848
        %v1850 = vpop.f32.mrf.mxu0
        %1851 = vmatprep.mubr.bf16.mxu0 0
        %1852 = vmatmul.mubr.bf16.gmra.mxu0 %v1416
        %v1853 = vpop.f32.mrf.mxu0
        %v1854 = vadd.f32 %v1757, %v1853
        %v1855 = vpop.f32.mrf.mxu0
        %v1856 = vpop.f32.mrf.mxu0
        %v1857 = vadd.f32 %v1760, %v1856
        %v1858 = vpop.f32.mrf.mxu0
        %1859 = vmatprep.mubr.bf16.mxu0 0
        %1860 = vmatmul.mubr.bf16.gmra.mxu0 %v1419
        %v1861 = vpop.f32.mrf.mxu0
        %v1862 = vadd.f32 %v1765, %v1861
        %v1863 = vpop.f32.mrf.mxu0
        %v1864 = vpop.f32.mrf.mxu0
        %v1865 = vadd.f32 %v1768, %v1864
        %v1866 = vpop.f32.mrf.mxu0
        %1867 = vmatprep.mubr.bf16.mxu0 0
        %1868 = vmatmul.mubr.bf16.gmra.mxu0 %v1422
        %v1869 = vpop.f32.mrf.mxu0
        %v1870 = vadd.f32 %v1773, %v1869
        %v1871 = vpop.f32.mrf.mxu0
        %v1872 = vpop.f32.mrf.mxu0
        %v1873 = vadd.f32 %v1776, %v1872
        %v1874 = vpop.f32.mrf.mxu0
        %1875 = vdwg.mxu0
        %1876 = vmatprep.subr.bf16.mxu0 0
        %1877 = vmatpush1.bf16.msra.mxu0 0
        %1878 = vmatprep.subr.bf16.mxu0 0
        %1879 = vmatpush1.bf16.msra.mxu0 0
        %1880 = vmatprep.subr.bf16.mxu0 0
        %1881 = vmatpush1.bf16.msra.mxu0 0
        %1882 = vmatprep.subr.bf16.mxu0 0
        %1883 = vmatpush1.bf16.msra.mxu0 0
        %1884 = vmatprep.subr.bf16.mxu0 0
        %1885 = vmatpush1.bf16.msra.mxu0 0
        %1886 = vmatprep.subr.bf16.mxu0 0
        %1887 = vmatpush1.bf16.msra.mxu0 0
        %1888 = vmatprep.subr.bf16.mxu0 0
        %1889 = vmatpush1.bf16.msra.mxu0 0
        %1890 = vmatprep.subr.bf16.mxu0 0
        %1891 = vmatpush1.bf16.msra.mxu0 %v922
        %1892 = vmatprep.subr.bf16.mxu0 0
        %1893 = vmatpush2.bf16.msra.mxu0 0
        %1894 = vmatprep.subr.bf16.mxu0 0
        %1895 = vmatpush2.bf16.msra.mxu0 0
        %1896 = vmatprep.subr.bf16.mxu0 0
        %1897 = vmatpush2.bf16.msra.mxu0 0
        %1898 = vmatprep.subr.bf16.mxu0 0
        %1899 = vmatpush2.bf16.msra.mxu0 0
        %1900 = vmatprep.subr.bf16.mxu0 0
        %1901 = vmatpush2.bf16.msra.mxu0 0
        %1902 = vmatprep.subr.bf16.mxu0 0
        %1903 = vmatpush2.bf16.msra.mxu0 0
        %1904 = vmatprep.subr.bf16.mxu0 0
        %1905 = vmatpush2.bf16.msra.mxu0 0
        %1906 = vmatprep.subr.bf16.mxu0 0
        %1907 = vmatpush2.bf16.msra.mxu0 0
        %1908 = vmatprep.mubr.bf16.mxu0 0
        %1909 = vmatmul.mubr.bf16.gmra.mxu0 %v1546
        %v1910 = vpop.f32.mrf.mxu0
        %v1911 = vadd.f32 0.0, %v1910
        %v1912 = vpop.f32.mrf.mxu0
        %v1913 = vpop.f32.mrf.mxu0
        %v1914 = vadd.f32 0.0, %v1913
        %v1915 = vpop.f32.mrf.mxu0
        %1916 = vmatprep.mubr.bf16.mxu0 0
        %1917 = vmatmul.mubr.bf16.gmra.mxu0 %v1549
        %v1918 = vpop.f32.mrf.mxu0
        %v1919 = vadd.f32 0.0, %v1918
        %v1920 = vpop.f32.mrf.mxu0
        %v1921 = vpop.f32.mrf.mxu0
        %v1922 = vadd.f32 0.0, %v1921
        %v1923 = vpop.f32.mrf.mxu0
        %1924 = vmatprep.mubr.bf16.mxu0 0
        %1925 = vmatmul.mubr.bf16.gmra.mxu0 %v1552
        %v1926 = vpop.f32.mrf.mxu0
        %v1927 = vadd.f32 0.0, %v1926
        %v1928 = vpop.f32.mrf.mxu0
        %v1929 = vpop.f32.mrf.mxu0
        %v1930 = vadd.f32 0.0, %v1929
        %v1931 = vpop.f32.mrf.mxu0
        %1932 = vmatprep.mubr.bf16.mxu0 0
        %1933 = vmatmul.mubr.bf16.gmra.mxu0 %v1555
        %v1934 = vpop.f32.mrf.mxu0
        %v1935 = vadd.f32 0.0, %v1934
        %v1936 = vpop.f32.mrf.mxu0
        %v1937 = vpop.f32.mrf.mxu0
        %v1938 = vadd.f32 0.0, %v1937
        %v1939 = vpop.f32.mrf.mxu0
        %1940 = vmatprep.mubr.bf16.mxu0 0
        %1941 = vmatmul.mubr.bf16.gmra.mxu0 %v1558
        %v1942 = vpop.f32.mrf.mxu0
        %v1943 = vadd.f32 0.0, %v1942
        %v1944 = vpop.f32.mrf.mxu0
        %v1945 = vpop.f32.mrf.mxu0
        %v1946 = vadd.f32 0.0, %v1945
        %v1947 = vpop.f32.mrf.mxu0
        %1948 = vmatprep.mubr.bf16.mxu0 0
        %1949 = vmatmul.mubr.bf16.gmra.mxu0 %v1561
        %v1950 = vpop.f32.mrf.mxu0
        %v1951 = vadd.f32 0.0, %v1950
        %v1952 = vpop.f32.mrf.mxu0
        %v1953 = vpop.f32.mrf.mxu0
        %v1954 = vadd.f32 0.0, %v1953
        %v1955 = vpop.f32.mrf.mxu0
        %1956 = vmatprep.mubr.bf16.mxu0 0
        %1957 = vmatmul.mubr.bf16.gmra.mxu0 %v1564
        %v1958 = vpop.f32.mrf.mxu0
        %v1959 = vadd.f32 0.0, %v1958
        %v1960 = vpop.f32.mrf.mxu0
        %v1961 = vpop.f32.mrf.mxu0
        %v1962 = vadd.f32 0.0, %v1961
        %v1963 = vpop.f32.mrf.mxu0
        %1964 = vmatprep.mubr.bf16.mxu0 0
        %1965 = vmatmul.mubr.bf16.gmra.mxu0 %v1567
        %v1966 = vpop.f32.mrf.mxu0
        %v1967 = vadd.f32 0.0, %v1966
        %v1968 = vpop.f32.mrf.mxu0
        %v1969 = vpop.f32.mrf.mxu0
        %v1970 = vadd.f32 0.0, %v1969
        %v1971 = vpop.f32.mrf.mxu0
        %1972 = vdwg.mxu0
        %v1973 = vadd.f32 %v1814, %v1911
        %v1974 = vadd.f32 %v1817, %v1914
        %v1975 = vadd.f32 %v1822, %v1919
        %v1976 = vadd.f32 %v1825, %v1922
        %v1977 = vadd.f32 %v1830, %v1927
        %v1978 = vadd.f32 %v1833, %v1930
        %v1979 = vadd.f32 %v1838, %v1935
        %v1980 = vadd.f32 %v1841, %v1938
        %v1981 = vadd.f32 %v1846, %v1943
        %v1982 = vadd.f32 %v1849, %v1946
        %v1983 = vadd.f32 %v1854, %v1951
        %v1984 = vadd.f32 %v1857, %v1954
        %v1985 = vadd.f32 %v1862, %v1959
        %v1986 = vadd.f32 %v1865, %v1962
        %v1987 = vadd.f32 %v1870, %v1967
        %v1988 = vadd.f32 %v1873, %v1970
        %vm1989 = vcmask 64512
        %1990 = vst.msk [vmem:[%s174] sm:$0xff] %vm1989, %v902
        %1991 = vst.msk [vmem:[%s174 + $0x8] sm:$0xff] %vm1989, %v903
        %1992 = vst.msk [vmem:[%s174 + $0x10] sm:$0xff] %vm1989, %v904
        %1993 = vst.msk [vmem:[%s174 + $0x18] sm:$0xff] %vm1989, %v905
        %1994 = vst.msk [vmem:[%s174 + $0x20] sm:$0xff] %vm1989, %v906
        %1995 = vst.msk [vmem:[%s174 + $0x28] sm:$0xff] %vm1989, %v907
        %1996 = vst.msk [vmem:[%s174 + $0x30] sm:$0xff] %vm1989, %v908
        %1997 = vst.msk [vmem:[%s174 + $0x38] sm:$0xff] %vm1989, %v909
        %1998 = vst.msk [vmem:[%s174 + $0x40] sm:$0xff] %vm1989, %v910
        %1999 = vst.msk [vmem:[%s174 + $0x48] sm:$0xff] %vm1989, %v911
        %2000 = vst.msk [vmem:[%s174 + $0x50] sm:$0xff] %vm1989, %v912
        %2001 = vst.msk [vmem:[%s174 + $0x58] sm:$0xff] %vm1989, %v913
        %2002 = vst.msk [vmem:[%s174 + $0x60] sm:$0xff] %vm1989, %v914
        %2003 = vst.msk [vmem:[%s174 + $0x68] sm:$0xff] %vm1989, %v915
        %2004 = vst.msk [vmem:[%s174 + $0x70] sm:$0xff] %vm1989, %v916
        %2005 = vst.msk [vmem:[%s174 + $0x78] sm:$0xff] %vm1989, %v917
        %s2006 = scalar_lea.vmem %s174, 128 [#allocation2]
        %2007 = vst.msk [vmem:[%s2006] sm:$0xff] %vm1989, %v1215
        %2008 = vst.msk [vmem:[%s2006 + $0x8] sm:$0xff] %vm1989, %v1216
        %2009 = vst.msk [vmem:[%s2006 + $0x10] sm:$0xff] %vm1989, %v1217
        %2010 = vst.msk [vmem:[%s2006 + $0x18] sm:$0xff] %vm1989, %v1218
        %2011 = vst.msk [vmem:[%s2006 + $0x20] sm:$0xff] %vm1989, %v1219
        %2012 = vst.msk [vmem:[%s2006 + $0x28] sm:$0xff] %vm1989, %v1220
        %2013 = vst.msk [vmem:[%s2006 + $0x30] sm:$0xff] %vm1989, %v1221
        %2014 = vst.msk [vmem:[%s2006 + $0x38] sm:$0xff] %vm1989, %v1222
        %2015 = vst.msk [vmem:[%s2006 + $0x40] sm:$0xff] %vm1989, %v1223
        %2016 = vst.msk [vmem:[%s2006 + $0x48] sm:$0xff] %vm1989, %v1224
        %2017 = vst.msk [vmem:[%s2006 + $0x50] sm:$0xff] %vm1989, %v1225
        %2018 = vst.msk [vmem:[%s2006 + $0x58] sm:$0xff] %vm1989, %v1226
        %2019 = vst.msk [vmem:[%s2006 + $0x60] sm:$0xff] %vm1989, %v1227
        %2020 = vst.msk [vmem:[%s2006 + $0x68] sm:$0xff] %vm1989, %v1228
        %2021 = vst.msk [vmem:[%s2006 + $0x70] sm:$0xff] %vm1989, %v1229
        %2022 = vst.msk [vmem:[%s2006 + $0x78] sm:$0xff] %vm1989, %v1230
        %s2023 = scalar_lea.vmem %s174, 256 [#allocation2]
        %2024 = vst.msk [vmem:[%s2023] sm:$0xff] %vm1989, %v1666
        %2025 = vst.msk [vmem:[%s2023 + $0x8] sm:$0xff] %vm1989, %v1667
        %2026 = vst.msk [vmem:[%s2023 + $0x10] sm:$0xff] %vm1989, %v1668
        %2027 = vst.msk [vmem:[%s2023 + $0x18] sm:$0xff] %vm1989, %v1669
        %2028 = vst.msk [vmem:[%s2023 + $0x20] sm:$0xff] %vm1989, %v1670
        %2029 = vst.msk [vmem:[%s2023 + $0x28] sm:$0xff] %vm1989, %v1671
        %2030 = vst.msk [vmem:[%s2023 + $0x30] sm:$0xff] %vm1989, %v1672
        %2031 = vst.msk [vmem:[%s2023 + $0x38] sm:$0xff] %vm1989, %v1673
        %2032 = vst.msk [vmem:[%s2023 + $0x40] sm:$0xff] %vm1989, %v1674
        %2033 = vst.msk [vmem:[%s2023 + $0x48] sm:$0xff] %vm1989, %v1675
        %2034 = vst.msk [vmem:[%s2023 + $0x50] sm:$0xff] %vm1989, %v1676
        %2035 = vst.msk [vmem:[%s2023 + $0x58] sm:$0xff] %vm1989, %v1677
        %2036 = vst.msk [vmem:[%s2023 + $0x60] sm:$0xff] %vm1989, %v1678
        %2037 = vst.msk [vmem:[%s2023 + $0x68] sm:$0xff] %vm1989, %v1679
        %2038 = vst.msk [vmem:[%s2023 + $0x70] sm:$0xff] %vm1989, %v1680
        %2039 = vst.msk [vmem:[%s2023 + $0x78] sm:$0xff] %vm1989, %v1681
        %s2040 = scalar_lea.vmem %s174, 384 [#allocation2]
        %2041 = vst.msk [vmem:[%s2040] sm:$0xff] %vm1989, %v1973
        %2042 = vst.msk [vmem:[%s2040 + $0x8] sm:$0xff] %vm1989, %v1974
        %2043 = vst.msk [vmem:[%s2040 + $0x10] sm:$0xff] %vm1989, %v1975
        %2044 = vst.msk [vmem:[%s2040 + $0x18] sm:$0xff] %vm1989, %v1976
        %2045 = vst.msk [vmem:[%s2040 + $0x20] sm:$0xff] %vm1989, %v1977
        %2046 = vst.msk [vmem:[%s2040 + $0x28] sm:$0xff] %vm1989, %v1978
        %2047 = vst.msk [vmem:[%s2040 + $0x30] sm:$0xff] %vm1989, %v1979
        %2048 = vst.msk [vmem:[%s2040 + $0x38] sm:$0xff] %vm1989, %v1980
        %2049 = vst.msk [vmem:[%s2040 + $0x40] sm:$0xff] %vm1989, %v1981
        %2050 = vst.msk [vmem:[%s2040 + $0x48] sm:$0xff] %vm1989, %v1982
        %2051 = vst.msk [vmem:[%s2040 + $0x50] sm:$0xff] %vm1989, %v1983
        %2052 = vst.msk [vmem:[%s2040 + $0x58] sm:$0xff] %vm1989, %v1984
        %2053 = vst.msk [vmem:[%s2040 + $0x60] sm:$0xff] %vm1989, %v1985
        %2054 = vst.msk [vmem:[%s2040 + $0x68] sm:$0xff] %vm1989, %v1986
        %2055 = vst.msk [vmem:[%s2040 + $0x70] sm:$0xff] %vm1989, %v1987
        %2056 = vst.msk [vmem:[%s2040 + $0x78] sm:$0xff] %vm1989, %v1988
        %s2057 = sand.u32 %s95, 1
        %s2058 = sand.u32 %s95, 1
        %s2059 = smul.addr %s2058, 512
        %s2060 = scalar_lea.vmem [#allocation2], %s2059
        // Predicated region
        $region29: #{dwt3d_forward.1} parent=27 // pred_check
          %p2061 = pneg %p105
        $region30: #{dwt3d_forward.1} parent=27 // pred_check_branch
          %2063 = sbr.rel (%p2061) target = $region32
        $region31: #{dwt3d_forward.1} parent=27 // pred_region
          %s2064 = smul.u32 4, %s18
          %s2065 = smul.u32 16, %s19
          %s2066 = sadd.s32 %s20, %s2065
          %s2067 = smul.addr %s2064, 32
          %s2068 = sadd.s32 %s2066, %s2067
          %s2069 = smul.addr %s2068, 8
          %s2070 = scalar_lea.vmem %s2, %s2069
          // Predicated region
          $region33: #{dwt3d_forward.1} parent=31 // pred_check
            _
          $region34: #{dwt3d_forward.1} parent=31 // pred_check_branch
            %2072 = sbr.rel (0) target = $region36
          $region35: #{dwt3d_forward.1} parent=31 // pred_region
            // Predicated region
            $region37: #{dwt3d_forward.1} parent=35 // pred_check
              _
            $region38: #{dwt3d_forward.1} parent=35 // pred_check_branch
              %2074 = sbr.rel (0) target = $region40
            $region39: #{dwt3d_forward.1} parent=35 // pred_region
              // Predicated region
              $region52: #{dwt3d_forward.1} parent=39 // pred_check
                _
              $region53: #{dwt3d_forward.1} parent=39 // pred_check_branch
                %2216 = sbr.rel (0) target = $region55
              $region54: #{dwt3d_forward.1} parent=39 // pred_region
                loop: start=0, step=1, limit=1
                $region56: #{dwt3d_forward.1} parent=54 // loop_pre_header
                  _
                $region57: #{dwt3d_forward.1} parent=54 // loop_header
                  %s2218 = sphi 0, %s2222
                  %p2219 = scmp.ge.s32.totalorder %s2218, 1
                  %s2223 = sphi %s2060, %s2060
                  %s2224 = sphi %s2070, %s2070
                $region58: #{dwt3d_forward.1} parent=54 // loop_header_branch
                  %2221 = sbr.rel (%p2219) target = $region62
                $region59: #{dwt3d_forward.1} parent=54 // loop_body
                  %v2225 = vld [vmem:[%s2223] sm:$0xff]
                  %2226 = vst [vmem:[%s2224] sm:$0xff] %v2225
                  %v2227 = vld [vmem:[%s2223 + $0x8] sm:$0xff]
                  %2228 = vst [vmem:[%s2224 + $0x8] sm:$0xff] %v2227
                  %v2229 = vld [vmem:[%s2223 + $0x10] sm:$0xff]
                  %2230 = vst [vmem:[%s2224 + $0x10] sm:$0xff] %v2229
                  %v2231 = vld [vmem:[%s2223 + $0x18] sm:$0xff]
                  %2232 = vst [vmem:[%s2224 + $0x18] sm:$0xff] %v2231
                  %v2233 = vld [vmem:[%s2223 + $0x20] sm:$0xff]
                  %2234 = vst [vmem:[%s2224 + $0x20] sm:$0xff] %v2233
                  %v2235 = vld [vmem:[%s2223 + $0x28] sm:$0xff]
                  %2236 = vst [vmem:[%s2224 + $0x28] sm:$0xff] %v2235
                  %v2237 = vld [vmem:[%s2223 + $0x30] sm:$0xff]
                  %2238 = vst [vmem:[%s2224 + $0x30] sm:$0xff] %v2237
                  %v2239 = vld [vmem:[%s2223 + $0x38] sm:$0xff]
                  %2240 = vst [vmem:[%s2224 + $0x38] sm:$0xff] %v2239
                  %v2241 = vld [vmem:[%s2223 + $0x40] sm:$0xff]
                  %2242 = vst [vmem:[%s2224 + $0x40] sm:$0xff] %v2241
                  %v2243 = vld [vmem:[%s2223 + $0x48] sm:$0xff]
                  %2244 = vst [vmem:[%s2224 + $0x48] sm:$0xff] %v2243
                  %v2245 = vld [vmem:[%s2223 + $0x50] sm:$0xff]
                  %2246 = vst [vmem:[%s2224 + $0x50] sm:$0xff] %v2245
                  %v2247 = vld [vmem:[%s2223 + $0x58] sm:$0xff]
                  %2248 = vst [vmem:[%s2224 + $0x58] sm:$0xff] %v2247
                  %v2249 = vld [vmem:[%s2223 + $0x60] sm:$0xff]
                  %2250 = vst [vmem:[%s2224 + $0x60] sm:$0xff] %v2249
                  %v2251 = vld [vmem:[%s2223 + $0x68] sm:$0xff]
                  %2252 = vst [vmem:[%s2224 + $0x68] sm:$0xff] %v2251
                  %v2253 = vld [vmem:[%s2223 + $0x70] sm:$0xff]
                  %2254 = vst [vmem:[%s2224 + $0x70] sm:$0xff] %v2253
                  %v2255 = vld [vmem:[%s2223 + $0x78] sm:$0xff]
                  %2256 = vst [vmem:[%s2224 + $0x78] sm:$0xff] %v2255
                  %v2257 = vld [vmem:[%s2223 + $0x80] sm:$0xff]
                  %2258 = vst [vmem:[%s2224 + $0x100] sm:$0xff] %v2257
                  %v2259 = vld [vmem:[%s2223 + $0x88] sm:$0xff]
                  %2260 = vst [vmem:[%s2224 + $0x108] sm:$0xff] %v2259
                  %v2261 = vld [vmem:[%s2223 + $0x90] sm:$0xff]
                  %2262 = vst [vmem:[%s2224 + $0x110] sm:$0xff] %v2261
                  %v2263 = vld [vmem:[%s2223 + $0x98] sm:$0xff]
                  %2264 = vst [vmem:[%s2224 + $0x118] sm:$0xff] %v2263
                  %v2265 = vld [vmem:[%s2223 + $0xa0] sm:$0xff]
                  %2266 = vst [vmem:[%s2224 + $0x120] sm:$0xff] %v2265
                  %v2267 = vld [vmem:[%s2223 + $0xa8] sm:$0xff]
                  %2268 = vst [vmem:[%s2224 + $0x128] sm:$0xff] %v2267
                  %v2269 = vld [vmem:[%s2223 + $0xb0] sm:$0xff]
                  %2270 = vst [vmem:[%s2224 + $0x130] sm:$0xff] %v2269
                  %v2271 = vld [vmem:[%s2223 + $0xb8] sm:$0xff]
                  %2272 = vst [vmem:[%s2224 + $0x138] sm:$0xff] %v2271
                  %v2273 = vld [vmem:[%s2223 + $0xc0] sm:$0xff]
                  %2274 = vst [vmem:[%s2224 + $0x140] sm:$0xff] %v2273
                  %v2275 = vld [vmem:[%s2223 + $0xc8] sm:$0xff]
                  %2276 = vst [vmem:[%s2224 + $0x148] sm:$0xff] %v2275
                  %v2277 = vld [vmem:[%s2223 + $0xd0] sm:$0xff]
                  %2278 = vst [vmem:[%s2224 + $0x150] sm:$0xff] %v2277
                  %v2279 = vld [vmem:[%s2223 + $0xd8] sm:$0xff]
                  %2280 = vst [vmem:[%s2224 + $0x158] sm:$0xff] %v2279
                  %v2281 = vld [vmem:[%s2223 + $0xe0] sm:$0xff]
                  %2282 = vst [vmem:[%s2224 + $0x160] sm:$0xff] %v2281
                  %v2283 = vld [vmem:[%s2223 + $0xe8] sm:$0xff]
                  %2284 = vst [vmem:[%s2224 + $0x168] sm:$0xff] %v2283
                  %v2285 = vld [vmem:[%s2223 + $0xf0] sm:$0xff]
                  %2286 = vst [vmem:[%s2224 + $0x170] sm:$0xff] %v2285
                  %v2287 = vld [vmem:[%s2223 + $0xf8] sm:$0xff]
                  %2288 = vst [vmem:[%s2224 + $0x178] sm:$0xff] %v2287
                  %v2289 = vld [vmem:[%s2223 + $0x100] sm:$0xff]
                  %2290 = vst [vmem:[%s2224 + $0x200] sm:$0xff] %v2289
                  %v2291 = vld [vmem:[%s2223 + $0x108] sm:$0xff]
                  %2292 = vst [vmem:[%s2224 + $0x208] sm:$0xff] %v2291
                  %v2293 = vld [vmem:[%s2223 + $0x110] sm:$0xff]
                  %2294 = vst [vmem:[%s2224 + $0x210] sm:$0xff] %v2293
                  %v2295 = vld [vmem:[%s2223 + $0x118] sm:$0xff]
                  %2296 = vst [vmem:[%s2224 + $0x218] sm:$0xff] %v2295
                  %v2297 = vld [vmem:[%s2223 + $0x120] sm:$0xff]
                  %2298 = vst [vmem:[%s2224 + $0x220] sm:$0xff] %v2297
                  %v2299 = vld [vmem:[%s2223 + $0x128] sm:$0xff]
                  %2300 = vst [vmem:[%s2224 + $0x228] sm:$0xff] %v2299
                  %v2301 = vld [vmem:[%s2223 + $0x130] sm:$0xff]
                  %2302 = vst [vmem:[%s2224 + $0x230] sm:$0xff] %v2301
                  %v2303 = vld [vmem:[%s2223 + $0x138] sm:$0xff]
                  %2304 = vst [vmem:[%s2224 + $0x238] sm:$0xff] %v2303
                  %v2305 = vld [vmem:[%s2223 + $0x140] sm:$0xff]
                  %2306 = vst [vmem:[%s2224 + $0x240] sm:$0xff] %v2305
                  %v2307 = vld [vmem:[%s2223 + $0x148] sm:$0xff]
                  %2308 = vst [vmem:[%s2224 + $0x248] sm:$0xff] %v2307
                  %v2309 = vld [vmem:[%s2223 + $0x150] sm:$0xff]
                  %2310 = vst [vmem:[%s2224 + $0x250] sm:$0xff] %v2309
                  %v2311 = vld [vmem:[%s2223 + $0x158] sm:$0xff]
                  %2312 = vst [vmem:[%s2224 + $0x258] sm:$0xff] %v2311
                  %v2313 = vld [vmem:[%s2223 + $0x160] sm:$0xff]
                  %2314 = vst [vmem:[%s2224 + $0x260] sm:$0xff] %v2313
                  %v2315 = vld [vmem:[%s2223 + $0x168] sm:$0xff]
                  %2316 = vst [vmem:[%s2224 + $0x268] sm:$0xff] %v2315
                  %v2317 = vld [vmem:[%s2223 + $0x170] sm:$0xff]
                  %2318 = vst [vmem:[%s2224 + $0x270] sm:$0xff] %v2317
                  %v2319 = vld [vmem:[%s2223 + $0x178] sm:$0xff]
                  %2320 = vst [vmem:[%s2224 + $0x278] sm:$0xff] %v2319
                  %v2321 = vld [vmem:[%s2223 + $0x180] sm:$0xff]
                  %2322 = vst [vmem:[%s2224 + $0x300] sm:$0xff] %v2321
                  %v2323 = vld [vmem:[%s2223 + $0x188] sm:$0xff]
                  %2324 = vst [vmem:[%s2224 + $0x308] sm:$0xff] %v2323
                  %v2325 = vld [vmem:[%s2223 + $0x190] sm:$0xff]
                  %2326 = vst [vmem:[%s2224 + $0x310] sm:$0xff] %v2325
                  %v2327 = vld [vmem:[%s2223 + $0x198] sm:$0xff]
                  %2328 = vst [vmem:[%s2224 + $0x318] sm:$0xff] %v2327
                  %v2329 = vld [vmem:[%s2223 + $0x1a0] sm:$0xff]
                  %2330 = vst [vmem:[%s2224 + $0x320] sm:$0xff] %v2329
                  %v2331 = vld [vmem:[%s2223 + $0x1a8] sm:$0xff]
                  %2332 = vst [vmem:[%s2224 + $0x328] sm:$0xff] %v2331
                  %v2333 = vld [vmem:[%s2223 + $0x1b0] sm:$0xff]
                  %2334 = vst [vmem:[%s2224 + $0x330] sm:$0xff] %v2333
                  %v2335 = vld [vmem:[%s2223 + $0x1b8] sm:$0xff]
                  %2336 = vst [vmem:[%s2224 + $0x338] sm:$0xff] %v2335
                  %v2337 = vld [vmem:[%s2223 + $0x1c0] sm:$0xff]
                  %2338 = vst [vmem:[%s2224 + $0x340] sm:$0xff] %v2337
                  %v2339 = vld [vmem:[%s2223 + $0x1c8] sm:$0xff]
                  %2340 = vst [vmem:[%s2224 + $0x348] sm:$0xff] %v2339
                  %v2341 = vld [vmem:[%s2223 + $0x1d0] sm:$0xff]
                  %2342 = vst [vmem:[%s2224 + $0x350] sm:$0xff] %v2341
                  %v2343 = vld [vmem:[%s2223 + $0x1d8] sm:$0xff]
                  %2344 = vst [vmem:[%s2224 + $0x358] sm:$0xff] %v2343
                  %v2345 = vld [vmem:[%s2223 + $0x1e0] sm:$0xff]
                  %2346 = vst [vmem:[%s2224 + $0x360] sm:$0xff] %v2345
                  %v2347 = vld [vmem:[%s2223 + $0x1e8] sm:$0xff]
                  %2348 = vst [vmem:[%s2224 + $0x368] sm:$0xff] %v2347
                  %v2349 = vld [vmem:[%s2223 + $0x1f0] sm:$0xff]
                  %2350 = vst [vmem:[%s2224 + $0x370] sm:$0xff] %v2349
                  %v2351 = vld [vmem:[%s2223 + $0x1f8] sm:$0xff]
                  %2352 = vst [vmem:[%s2224 + $0x378] sm:$0xff] %v2351
                $region60: #{dwt3d_forward.1} parent=54 // loop_footer
                  %s2222 = sadd.s32 1, %s2218
                $region61: #{dwt3d_forward.1} parent=54 // loop_footer_branch
                  %2217 = sbr.rel target = $region57
                $region62: #{dwt3d_forward.1} parent=54 // loop_exit
                  _
              $region55: #{dwt3d_forward.1} parent=39 // pred_fallthru
                _
              // Predicated region
              $region63: #{dwt3d_forward.1} parent=39 // pred_check
                _
              $region64: #{dwt3d_forward.1} parent=39 // pred_check_branch
                %2354 = sbr.rel target = $region66
              $region65: #{dwt3d_forward.1} parent=39 // pred_region
                _
              $region66: #{dwt3d_forward.1} parent=39 // pred_fallthru
                _
            $region40: #{dwt3d_forward.1} parent=35 // pred_fallthru
              _
            // Predicated region
            $region41: #{dwt3d_forward.1} parent=35 // pred_check
              _
            $region42: #{dwt3d_forward.1} parent=35 // pred_check_branch
              %2076 = sbr.rel target = $region44
            $region43: #{dwt3d_forward.1} parent=35 // pred_region
              %s2078 = ssub.s32 256, 1
              loop: start=0, step=1, limit=1
              $region45: #{dwt3d_forward.1} parent=43 // loop_pre_header
                _
              $region46: #{dwt3d_forward.1} parent=43 // loop_header
                %s2080 = sphi 0, %s2084
                %p2081 = scmp.ge.s32.totalorder %s2080, 1
                %s2085 = sphi %s2060, %s2060
                %s2086 = sphi %s2070, %s2070
              $region47: #{dwt3d_forward.1} parent=43 // loop_header_branch
                %2083 = sbr.rel (%p2081) target = $region51
              $region48: #{dwt3d_forward.1} parent=43 // loop_body
                %v2087 = vld [vmem:[%s2085] sm:%s2078]
                %2088 = vst [vmem:[%s2086] sm:%s2078] %v2087
                %v2089 = vld [vmem:[%s2085 + $0x8] sm:%s2078]
                %2090 = vst [vmem:[%s2086 + $0x8] sm:%s2078] %v2089
                %v2091 = vld [vmem:[%s2085 + $0x10] sm:%s2078]
                %2092 = vst [vmem:[%s2086 + $0x10] sm:%s2078] %v2091
                %v2093 = vld [vmem:[%s2085 + $0x18] sm:%s2078]
                %2094 = vst [vmem:[%s2086 + $0x18] sm:%s2078] %v2093
                %v2095 = vld [vmem:[%s2085 + $0x20] sm:%s2078]
                %2096 = vst [vmem:[%s2086 + $0x20] sm:%s2078] %v2095
                %v2097 = vld [vmem:[%s2085 + $0x28] sm:%s2078]
                %2098 = vst [vmem:[%s2086 + $0x28] sm:%s2078] %v2097
                %v2099 = vld [vmem:[%s2085 + $0x30] sm:%s2078]
                %2100 = vst [vmem:[%s2086 + $0x30] sm:%s2078] %v2099
                %v2101 = vld [vmem:[%s2085 + $0x38] sm:%s2078]
                %2102 = vst [vmem:[%s2086 + $0x38] sm:%s2078] %v2101
                %v2103 = vld [vmem:[%s2085 + $0x40] sm:%s2078]
                %2104 = vst [vmem:[%s2086 + $0x40] sm:%s2078] %v2103
                %v2105 = vld [vmem:[%s2085 + $0x48] sm:%s2078]
                %2106 = vst [vmem:[%s2086 + $0x48] sm:%s2078] %v2105
                %v2107 = vld [vmem:[%s2085 + $0x50] sm:%s2078]
                %2108 = vst [vmem:[%s2086 + $0x50] sm:%s2078] %v2107
                %v2109 = vld [vmem:[%s2085 + $0x58] sm:%s2078]
                %2110 = vst [vmem:[%s2086 + $0x58] sm:%s2078] %v2109
                %v2111 = vld [vmem:[%s2085 + $0x60] sm:%s2078]
                %2112 = vst [vmem:[%s2086 + $0x60] sm:%s2078] %v2111
                %v2113 = vld [vmem:[%s2085 + $0x68] sm:%s2078]
                %2114 = vst [vmem:[%s2086 + $0x68] sm:%s2078] %v2113
                %v2115 = vld [vmem:[%s2085 + $0x70] sm:%s2078]
                %2116 = vst [vmem:[%s2086 + $0x70] sm:%s2078] %v2115
                %v2117 = vld [vmem:[%s2085 + $0x78] sm:%s2078]
                %2118 = vst [vmem:[%s2086 + $0x78] sm:%s2078] %v2117
                %v2119 = vld [vmem:[%s2085 + $0x80] sm:%s2078]
                %2120 = vst [vmem:[%s2086 + $0x100] sm:%s2078] %v2119
                %v2121 = vld [vmem:[%s2085 + $0x88] sm:%s2078]
                %2122 = vst [vmem:[%s2086 + $0x108] sm:%s2078] %v2121
                %v2123 = vld [vmem:[%s2085 + $0x90] sm:%s2078]
                %2124 = vst [vmem:[%s2086 + $0x110] sm:%s2078] %v2123
                %v2125 = vld [vmem:[%s2085 + $0x98] sm:%s2078]
                %2126 = vst [vmem:[%s2086 + $0x118] sm:%s2078] %v2125
                %v2127 = vld [vmem:[%s2085 + $0xa0] sm:%s2078]
                %2128 = vst [vmem:[%s2086 + $0x120] sm:%s2078] %v2127
                %v2129 = vld [vmem:[%s2085 + $0xa8] sm:%s2078]
                %2130 = vst [vmem:[%s2086 + $0x128] sm:%s2078] %v2129
                %v2131 = vld [vmem:[%s2085 + $0xb0] sm:%s2078]
                %2132 = vst [vmem:[%s2086 + $0x130] sm:%s2078] %v2131
                %v2133 = vld [vmem:[%s2085 + $0xb8] sm:%s2078]
                %2134 = vst [vmem:[%s2086 + $0x138] sm:%s2078] %v2133
                %v2135 = vld [vmem:[%s2085 + $0xc0] sm:%s2078]
                %2136 = vst [vmem:[%s2086 + $0x140] sm:%s2078] %v2135
                %v2137 = vld [vmem:[%s2085 + $0xc8] sm:%s2078]
                %2138 = vst [vmem:[%s2086 + $0x148] sm:%s2078] %v2137
                %v2139 = vld [vmem:[%s2085 + $0xd0] sm:%s2078]
                %2140 = vst [vmem:[%s2086 + $0x150] sm:%s2078] %v2139
                %v2141 = vld [vmem:[%s2085 + $0xd8] sm:%s2078]
                %2142 = vst [vmem:[%s2086 + $0x158] sm:%s2078] %v2141
                %v2143 = vld [vmem:[%s2085 + $0xe0] sm:%s2078]
                %2144 = vst [vmem:[%s2086 + $0x160] sm:%s2078] %v2143
                %v2145 = vld [vmem:[%s2085 + $0xe8] sm:%s2078]
                %2146 = vst [vmem:[%s2086 + $0x168] sm:%s2078] %v2145
                %v2147 = vld [vmem:[%s2085 + $0xf0] sm:%s2078]
                %2148 = vst [vmem:[%s2086 + $0x170] sm:%s2078] %v2147
                %v2149 = vld [vmem:[%s2085 + $0xf8] sm:%s2078]
                %2150 = vst [vmem:[%s2086 + $0x178] sm:%s2078] %v2149
                %v2151 = vld [vmem:[%s2085 + $0x100] sm:%s2078]
                %2152 = vst [vmem:[%s2086 + $0x200] sm:%s2078] %v2151
                %v2153 = vld [vmem:[%s2085 + $0x108] sm:%s2078]
                %2154 = vst [vmem:[%s2086 + $0x208] sm:%s2078] %v2153
                %v2155 = vld [vmem:[%s2085 + $0x110] sm:%s2078]
                %2156 = vst [vmem:[%s2086 + $0x210] sm:%s2078] %v2155
                %v2157 = vld [vmem:[%s2085 + $0x118] sm:%s2078]
                %2158 = vst [vmem:[%s2086 + $0x218] sm:%s2078] %v2157
                %v2159 = vld [vmem:[%s2085 + $0x120] sm:%s2078]
                %2160 = vst [vmem:[%s2086 + $0x220] sm:%s2078] %v2159
                %v2161 = vld [vmem:[%s2085 + $0x128] sm:%s2078]
                %2162 = vst [vmem:[%s2086 + $0x228] sm:%s2078] %v2161
                %v2163 = vld [vmem:[%s2085 + $0x130] sm:%s2078]
                %2164 = vst [vmem:[%s2086 + $0x230] sm:%s2078] %v2163
                %v2165 = vld [vmem:[%s2085 + $0x138] sm:%s2078]
                %2166 = vst [vmem:[%s2086 + $0x238] sm:%s2078] %v2165
                %v2167 = vld [vmem:[%s2085 + $0x140] sm:%s2078]
                %2168 = vst [vmem:[%s2086 + $0x240] sm:%s2078] %v2167
                %v2169 = vld [vmem:[%s2085 + $0x148] sm:%s2078]
                %2170 = vst [vmem:[%s2086 + $0x248] sm:%s2078] %v2169
                %v2171 = vld [vmem:[%s2085 + $0x150] sm:%s2078]
                %2172 = vst [vmem:[%s2086 + $0x250] sm:%s2078] %v2171
                %v2173 = vld [vmem:[%s2085 + $0x158] sm:%s2078]
                %2174 = vst [vmem:[%s2086 + $0x258] sm:%s2078] %v2173
                %v2175 = vld [vmem:[%s2085 + $0x160] sm:%s2078]
                %2176 = vst [vmem:[%s2086 + $0x260] sm:%s2078] %v2175
                %v2177 = vld [vmem:[%s2085 + $0x168] sm:%s2078]
                %2178 = vst [vmem:[%s2086 + $0x268] sm:%s2078] %v2177
                %v2179 = vld [vmem:[%s2085 + $0x170] sm:%s2078]
                %2180 = vst [vmem:[%s2086 + $0x270] sm:%s2078] %v2179
                %v2181 = vld [vmem:[%s2085 + $0x178] sm:%s2078]
                %2182 = vst [vmem:[%s2086 + $0x278] sm:%s2078] %v2181
                %v2183 = vld [vmem:[%s2085 + $0x180] sm:%s2078]
                %2184 = vst [vmem:[%s2086 + $0x300] sm:%s2078] %v2183
                %v2185 = vld [vmem:[%s2085 + $0x188] sm:%s2078]
                %2186 = vst [vmem:[%s2086 + $0x308] sm:%s2078] %v2185
                %v2187 = vld [vmem:[%s2085 + $0x190] sm:%s2078]
                %2188 = vst [vmem:[%s2086 + $0x310] sm:%s2078] %v2187
                %v2189 = vld [vmem:[%s2085 + $0x198] sm:%s2078]
                %2190 = vst [vmem:[%s2086 + $0x318] sm:%s2078] %v2189
                %v2191 = vld [vmem:[%s2085 + $0x1a0] sm:%s2078]
                %2192 = vst [vmem:[%s2086 + $0x320] sm:%s2078] %v2191
                %v2193 = vld [vmem:[%s2085 + $0x1a8] sm:%s2078]
                %2194 = vst [vmem:[%s2086 + $0x328] sm:%s2078] %v2193
                %v2195 = vld [vmem:[%s2085 + $0x1b0] sm:%s2078]
                %2196 = vst [vmem:[%s2086 + $0x330] sm:%s2078] %v2195
                %v2197 = vld [vmem:[%s2085 + $0x1b8] sm:%s2078]
                %2198 = vst [vmem:[%s2086 + $0x338] sm:%s2078] %v2197
                %v2199 = vld [vmem:[%s2085 + $0x1c0] sm:%s2078]
                %2200 = vst [vmem:[%s2086 + $0x340] sm:%s2078] %v2199
                %v2201 = vld [vmem:[%s2085 + $0x1c8] sm:%s2078]
                %2202 = vst [vmem:[%s2086 + $0x348] sm:%s2078] %v2201
                %v2203 = vld [vmem:[%s2085 + $0x1d0] sm:%s2078]
                %2204 = vst [vmem:[%s2086 + $0x350] sm:%s2078] %v2203
                %v2205 = vld [vmem:[%s2085 + $0x1d8] sm:%s2078]
                %2206 = vst [vmem:[%s2086 + $0x358] sm:%s2078] %v2205
                %v2207 = vld [vmem:[%s2085 + $0x1e0] sm:%s2078]
                %2208 = vst [vmem:[%s2086 + $0x360] sm:%s2078] %v2207
                %v2209 = vld [vmem:[%s2085 + $0x1e8] sm:%s2078]
                %2210 = vst [vmem:[%s2086 + $0x368] sm:%s2078] %v2209
                %v2211 = vld [vmem:[%s2085 + $0x1f0] sm:%s2078]
                %2212 = vst [vmem:[%s2086 + $0x370] sm:%s2078] %v2211
                %v2213 = vld [vmem:[%s2085 + $0x1f8] sm:%s2078]
                %2214 = vst [vmem:[%s2086 + $0x378] sm:%s2078] %v2213
              $region49: #{dwt3d_forward.1} parent=43 // loop_footer
                %s2084 = sadd.s32 1, %s2080
              $region50: #{dwt3d_forward.1} parent=43 // loop_footer_branch
                %2079 = sbr.rel target = $region46
              $region51: #{dwt3d_forward.1} parent=43 // loop_exit
                _
            $region44: #{dwt3d_forward.1} parent=35 // pred_fallthru
              _
          $region36: #{dwt3d_forward.1} parent=31 // pred_fallthru
            _
          %2355 = vnop
        $region32: #{dwt3d_forward.1} parent=27 // pred_fallthru
          _
      $region28: #{dwt3d_forward.1} parent=5 // pred_fallthru
        _
      %p2356 = scmp.le.s32.totalorder 2, %s8
      // Predicated region
      $region67: #{dwt3d_forward.1} parent=5 // pred_check
        %p2357 = pneg %p2356
      $region68: #{dwt3d_forward.1} parent=5 // pred_check_branch
        %2359 = sbr.rel (%p2357) target = $region70
      $region69: #{dwt3d_forward.1} parent=5 // pred_region
        %s2360 = ssub.s32 %s8, 2
        // Predicated region
        $region71: #{dwt3d_forward.1} parent=69 // pred_check
          %p2361 = pneg %p111
        $region72: #{dwt3d_forward.1} parent=69 // pred_check_branch
          %2363 = sbr.rel (%p2361) target = $region74
        $region73: #{dwt3d_forward.1} parent=69 // pred_region
          %s2364 = sand.u32 %s96, 1
          %s2365 = sand.u32 %s96, 1
          %s2366 = smul.addr %s2365, 512
          %s2367 = scalar_lea.vmem [#allocation2], %s2366
        $region74: #{dwt3d_forward.1} parent=69 // pred_fallthru
          _
      $region70: #{dwt3d_forward.1} parent=5 // pred_fallthru
        _
    $region6: #{dwt3d_forward.1} parent=1 // loop_footer
      %s12 = sadd.s32 1, %s8
    $region7: #{dwt3d_forward.1} parent=1 // loop_footer_branch
      %7 = sbr.rel target = $region3
    $region8: #{dwt3d_forward.1} parent=1 // loop_exit
      _

</llo_original>
